<compile_context>
chip_gen: v6e
topology: v6e:2x2x1
jax: 0.10.0
libtpu: 0.0.40
codegen_flags: <defaults>
</compile_context>

<pallas_src>
import functools

import jax
import jax.numpy as jnp
from jax.experimental import pallas as pl
from jax.experimental.pallas import tpu as pltpu


def _mha_kernel(x_ref, wqkv_ref, wout_ref, bout_ref, o_ref, *, heads):
    # x_ref:   (Bblk, N, C)    compute dtype (bf16 or f32)
    # wqkv_ref:(C, 3C)         compute dtype, Q columns pre-scaled by 1/sqrt(hd)
    # wout_ref:(C, C)          compute dtype
    # bout_ref:(1, C)          f32
    # o_ref:   (Bblk, N, C)    original input dtype
    Bblk, N, C = x_ref.shape
    hd = C // heads
    M = Bblk * N
    cdt = x_ref.dtype

    # Flatten the batch block into one lane/sublane-dense 2-D slab (only
    # leading dims are merged -> layout free).
    x2 = x_ref[...].reshape(M, C)

    # QKV projection for all heads in a single full-width MXU matmul
    # (output width 3*C -> full lane fill), f32 accumulation.  The softmax
    # scale is already folded into the Q columns (wrapper, trace time).
    qkv = jnp.dot(x2, wqkv_ref[...], preferred_element_type=jnp.float32)
    qkv = qkv.astype(cdt)                                         # (M, 3C)

    head_out = []
    for h in range(heads):
        # Static lane slices of the fused QKV slab (head-major column order
        # matches torch's reshape(B, N, 3, heads, hd)).
        q = qkv[:, h * hd:(h + 1) * hd].reshape(Bblk, N, hd)
        k = qkv[:, C + h * hd:C + (h + 1) * hd].reshape(Bblk, N, hd)
        v = qkv[:, 2 * C + h * hd:2 * C + (h + 1) * hd].reshape(Bblk, N, hd)

        # Scores: batched einsum contracting the last dim (no transposes).
        s = jnp.einsum("bqd,bkd->bqk", q, k,
                       preferred_element_type=jnp.float32)        # (Bblk, N, N)

        # Numerically-stable softmax statistics in f32.
        m = jnp.max(s, axis=-1, keepdims=True)
        p = jnp.exp(s - m)                                        # unnormalized
        denom = jnp.sum(p, axis=-1, keepdims=True)

        # attn @ V with unnormalized probabilities (bf16 operands when the
        # compute dtype is bf16), then an exact hd-wide normalization: the
        # per-row scale moves from an (N, N) VALU multiply to an (N, hd) one,
        # and the exact divide avoids the approx-reciprocal error that broke
        # parity with the reference.
        o_h = jnp.einsum("bqk,bkd->bqd", p.astype(cdt), v,
                         preferred_element_type=jnp.float32)      # (Bblk, N, hd)
        o_h = o_h * (1.0 / denom)
        head_out.append(o_h.reshape(M, hd).astype(cdt))

    # Concatenate heads along lanes (copy only) and run one full-width output
    # projection; the bias add is the only epilogue (f32 accumulation).
    out_heads = jnp.concatenate(head_out, axis=-1)                # (M, C)
    out = jnp.dot(out_heads, wout_ref[...],
                  preferred_element_type=jnp.float32) + bout_ref[...]
    o_ref[...] = out.reshape(Bblk, N, C).astype(o_ref.dtype)


def _generation_vmem_cap_bytes():
    """Generation-aware scoped-VMEM cap: v7x has 64 MiB physical (leave
    headroom), v5e/v6e have 128 MiB physical."""
    try:
        kind = jax.devices()[0].device_kind.lower()
    except Exception:  # pragma: no cover - e.g. no devices during tracing
        kind = ""
    if "v7" in kind:
        return 48 * 1024 * 1024
    return 100 * 1024 * 1024


def _estimate_vmem_bytes(block_b, N, C, cbytes):
    """Rough per-step VMEM footprint for the chosen tiles (with headroom)."""
    M = block_b * N
    io = 2 * M * C * cbytes + 2 * M * C * 4            # double-buffered x / out tiles
    weights = (3 * C * C + C * C) * cbytes + 4 * C     # single-buffered weights + f32 bias
    interm = (M * 3 * C * cbytes                       # fused qkv slab
              + M * C * cbytes                         # concatenated head outputs
              + M * C * 4                              # f32 output accumulator
              + 2 * M * N * 4)                         # per-head scores + probs (f32)
    return io + weights + 2 * interm                   # 2x headroom for relayouts/spills


def _pick_block_b(B, N, C, cbytes, *, target_rows=512, min_steps=4, min_rows=128):
    """Largest divisor of B with block_b*N <= ~target_rows that fits the VMEM
    cap, preferring >=min_steps grid steps (v7x megacore overlap) as long as
    each step still presents >=min_rows sublane-dense rows to the MXU."""
    divisors = [d for d in range(1, B + 1) if B % d == 0]
    cap = _generation_vmem_cap_bytes()

    def fits(d):
        return _estimate_vmem_bytes(d, N, C, cbytes) <= cap

    cands = [d for d in divisors if d * N <= max(target_rows, N) and fits(d)]
    block_b = max(cands) if cands else 1

    if B // block_b < min_steps:
        picked = None
        for d in reversed(divisors):
            if B // d >= min_steps and d * N >= min_rows and fits(d):
                picked = d
                break
        if picked is None:
            for d in reversed(divisors):
                if B // d >= 2 and d * N >= min_rows and fits(d):
                    picked = d
                    break
        if picked is not None:
            block_b = picked
    return block_b


def multi_head_attention(x, w_qkv, w_out, b_out, *, heads, block_b=None,
                         compute_dtype=jnp.bfloat16):
    """Forward pass of the ViT MultiHeadAttention module.

    compute_dtype is the MXU operand dtype (bf16 recommended on v5e/v6e/v7x);
    all accumulation and softmax statistics stay in f32, and the output keeps
    x's dtype.  Pass compute_dtype=jnp.float32 for exact parity.
    """
    B, N, C = x.shape
    assert C % heads == 0, "dim must be divisible by heads"
    hd = C // heads
    scale = hd ** (-0.5)

    if compute_dtype is None:
        compute_dtype = x.dtype
    cbytes = jnp.dtype(compute_dtype).itemsize

    if block_b is None:
        block_b = _pick_block_b(B, N, C, cbytes)
    assert B % block_b == 0

    # ---- Wrapper-side (trace-time) parameter preparation ----
    # Fold the softmax scale into the Q columns (columns [0, C) of the fused
    # (C, 3C) weight), then cast the MXU operands to the compute dtype.  The
    # bias stays f32 (it is added to the f32 accumulator).
    w_qkv_s = (w_qkv.astype(jnp.float32)
               .at[:, :C].multiply(scale)
               .astype(compute_dtype))
    w_out_c = w_out.astype(compute_dtype)
    b_out2d = b_out.astype(jnp.float32).reshape(1, C)
    x_c = x.astype(compute_dtype)

    vmem_limit = int(min(_generation_vmem_cap_bytes(),
                         max(_estimate_vmem_bytes(block_b, N, C, cbytes),
                             32 * 1024 * 1024)))

    kernel = functools.partial(_mha_kernel, heads=heads)

    return pl.pallas_call(
        kernel,
        out_shape=jax.ShapeDtypeStruct((B, N, C), x.dtype),
        grid_spec=pltpu.PrefetchScalarGridSpec(
            num_scalar_prefetch=0,
            grid=(B // block_b,),
            in_specs=[
                pl.BlockSpec((block_b, N, C), lambda b: (b, 0, 0)),
                # Grid-invariant weights / bias: whole-array, single-buffered
                # VMEM residents (no double-buffer copy, no per-step re-DMA).
                pl.BlockSpec(memory_space=pltpu.MemorySpace.VMEM),
                pl.BlockSpec(memory_space=pltpu.MemorySpace.VMEM),
                pl.BlockSpec(memory_space=pltpu.MemorySpace.VMEM),
            ],
            out_specs=pl.BlockSpec((block_b, N, C), lambda b: (b, 0, 0)),
        ),
        compiler_params=pltpu.CompilerParams(
            dimension_semantics=("parallel",),
            vmem_limit_bytes=vmem_limit,
        ),
    )(x_c, w_qkv_s, w_out_c, b_out2d)


def reference_mha(x, w_qkv, w_out, b_out, *, heads):
    """Pure-JAX reference mirroring the PyTorch forward."""
    B, N, C = x.shape
    hd = C // heads
    scale = hd ** (-0.5)
    qkv = jnp.einsum("bnc,cd->bnd", x, w_qkv)                 # (B, N, 3C)
    qkv = qkv.reshape(B, N, 3, heads, hd).transpose(2, 0, 3, 1, 4)
    q, k, v = qkv[0], qkv[1], qkv[2]                          # (B, H, N, hd)
    dots = jnp.einsum("bhqd,bhkd->bhqk", q, k) * scale
    attn = jax.nn.softmax(dots, axis=-1)
    out = jnp.einsum("bhqk,bhkd->bhqd", attn, v)              # (B, H, N, hd)
    out = out.transpose(0, 2, 1, 3).reshape(B, N, C)
    return jnp.einsum("bnc,cd->bnd", out, w_out) + b_out


if __name__ == "__main__":
    # Small shapes consistent with the module: batch=2, seq=8, dim=32, heads=4.
    B, N, C, heads = 2, 8, 32, 4

    key = jax.random.PRNGKey(0)
    kx, kqkv, kout, kb = jax.random.split(key, 4)

    x = jax.random.normal(kx, (B, N, C), dtype=jnp.float32)
    # Deterministic synthetic parameters (shapes from nn.Linear in __init__).
    w_qkv = jax.random.normal(kqkv, (C, 3 * C), dtype=jnp.float32) * (C ** -0.5)
    w_out = jax.random.normal(kout, (C, C), dtype=jnp.float32) * (C ** -0.5)
    b_out = jax.random.normal(kb, (C,), dtype=jnp.float32) * 0.01

    y_ref = reference_mha(x, w_qkv, w_out, b_out, heads=heads)

    # Exact-parity path: f32 MXU operands, exact softmax normalization.
    y_f32 = multi_head_attention(x, w_qkv, w_out, b_out, heads=heads,
                                 compute_dtype=jnp.float32)
    y_f32 = jax.block_until_ready(y_f32)
    assert y_f32.shape == (B, N, C)
    assert jnp.allclose(y_f32, y_ref, atol=1e-3, rtol=1e-3), "f32 mismatch vs reference"

    # Production/perf path (per review): bf16 MXU operands, f32 accumulation.
    y_bf16 = multi_head_attention(x, w_qkv, w_out, b_out, heads=heads,
                                  compute_dtype=jnp.bfloat16)
    y_bf16 = jax.block_until_ready(y_bf16)
    assert y_bf16.shape == (B, N, C)
    assert jnp.allclose(y_bf16, y_ref, atol=1e-1, rtol=1e-1), "bf16 mismatch vs reference"

    print("KERNEL_OK")
</pallas_src>

<mosaic_0001>
module attributes {stable_mosaic.version = 11 : i64} {
  func.func @_mha_kernel(%arg0: i32, %arg1: memref<2x8x32xf32, #tpu.memory_space<vmem>>, %arg2: memref<32x96xf32, #tpu.memory_space<vmem>>, %arg3: memref<32x32xf32, #tpu.memory_space<vmem>>, %arg4: memref<1x32xf32, #tpu.memory_space<vmem>>, %arg5: memref<2x8x32xf32, #tpu.memory_space<vmem>>) attributes {dimension_semantics = [#tpu.dimension_semantics<parallel>], iteration_bounds = array<i64: 1>, scalar_prefetch = 0 : i64, scratch_operands = 0 : i64, tpu.core_type = #tpu.core_type<tc>, window_params = [{transform_indices = @transform_0, window_bounds = array<i64: 2, 8, 32>}, {pipeline_mode = #tpu.pipeline_mode<synchronous>, transform_indices = @transform_1, window_bounds = array<i64: 32, 96>}, {pipeline_mode = #tpu.pipeline_mode<synchronous>, transform_indices = @transform_2, window_bounds = array<i64: 32, 32>}, {pipeline_mode = #tpu.pipeline_mode<synchronous>, transform_indices = @transform_3, window_bounds = array<i64: 1, 32>}, {transform_indices = @transform_4, window_bounds = array<i64: 2, 8, 32>}]} {
    %c0 = arith.constant 0 : index
    %c0_0 = arith.constant 0 : index
    %c0_1 = arith.constant 0 : index
    %0 = vector.load %arg1[%c0, %c0_0, %c0_1] : memref<2x8x32xf32, #tpu.memory_space<vmem>>, vector<2x8x32xf32>
    %1 = vector.shape_cast %0 : vector<2x8x32xf32> to vector<16x32xf32>
    %c0_2 = arith.constant 0 : index
    %c0_3 = arith.constant 0 : index
    %2 = vector.load %arg2[%c0_2, %c0_3] : memref<32x96xf32, #tpu.memory_space<vmem>>, vector<32x96xf32>
    %cst = arith.constant dense<0.000000e+00> : vector<16x96xf32>
    %3 = tpu.matmul %1, %2, %cst {dimension_numbers = #tpu.dot_dimension_numbers<[1], [0], [0], [1], [0, 0, 1, 1], [], []>} : vector<16x32xf32>, vector<32x96xf32>, vector<16x96xf32> -> vector<16x96xf32>
    %4 = vector.extract_strided_slice %3 {offsets = [0, 0], sizes = [16, 8], strides = [1, 1]} : vector<16x96xf32> to vector<16x8xf32>
    %5 = vector.shape_cast %4 : vector<16x8xf32> to vector<2x8x8xf32>
    %6 = vector.extract_strided_slice %3 {offsets = [0, 32], sizes = [16, 8], strides = [1, 1]} : vector<16x96xf32> to vector<16x8xf32>
    %7 = vector.shape_cast %6 : vector<16x8xf32> to vector<2x8x8xf32>
    %8 = vector.extract_strided_slice %3 {offsets = [0, 64], sizes = [16, 8], strides = [1, 1]} : vector<16x96xf32> to vector<16x8xf32>
    %9 = vector.shape_cast %8 : vector<16x8xf32> to vector<2x8x8xf32>
    "tpu.trace_start"() <{level = 10 : i32, message = "bqd,bkd->bqk"}> : () -> ()
    %cst_4 = arith.constant dense<0.000000e+00> : vector<2x8x8xf32>
    %10 = tpu.matmul %5, %7, %cst_4 {dimension_numbers = #tpu.dot_dimension_numbers<[2], [2], [1], [1], [0, 0, 0, 1, 1, 1], [0], [0]>} : vector<2x8x8xf32>, vector<2x8x8xf32>, vector<2x8x8xf32> -> vector<2x8x8xf32>
    "tpu.trace_stop"() : () -> ()
    %cst_5 = arith.constant dense<0xFF800000> : vector<2x8xf32>
    %11 = vector.multi_reduction <maximumf>, %10, %cst_5 [2] : vector<2x8x8xf32> to vector<2x8xf32>
    %12 = vector.shape_cast %11 : vector<2x8xf32> to vector<2x8x1xf32>
    %13 = vector.broadcast %12 : vector<2x8x1xf32> to vector<2x8x8xf32>
    %14 = arith.subf %10, %13 : vector<2x8x8xf32>
    %15 = math.exp %14 : vector<2x8x8xf32>
    %cst_6 = arith.constant dense<0.000000e+00> : vector<2x8xf32>
    %16 = vector.multi_reduction <add>, %15, %cst_6 [2] : vector<2x8x8xf32> to vector<2x8xf32>
    %17 = vector.shape_cast %16 : vector<2x8xf32> to vector<2x8x1xf32>
    "tpu.trace_start"() <{level = 10 : i32, message = "bqk,bkd->bqd"}> : () -> ()
    %cst_7 = arith.constant dense<0.000000e+00> : vector<2x8x8xf32>
    %18 = tpu.matmul %15, %9, %cst_7 {dimension_numbers = #tpu.dot_dimension_numbers<[2], [1], [1], [2], [0, 0, 0, 1, 1, 2], [0], [0]>} : vector<2x8x8xf32>, vector<2x8x8xf32>, vector<2x8x8xf32> -> vector<2x8x8xf32>
    "tpu.trace_stop"() : () -> ()
    %cst_8 = arith.constant 1.000000e+00 : f32
    %19 = vector.broadcast %cst_8 : f32 to vector<2x8x1xf32>
    %20 = arith.divf %19, %17 : vector<2x8x1xf32>
    %21 = vector.broadcast %20 : vector<2x8x1xf32> to vector<2x8x8xf32>
    %22 = arith.mulf %18, %21 : vector<2x8x8xf32>
    %23 = vector.shape_cast %22 : vector<2x8x8xf32> to vector<16x8xf32>
    %24 = vector.extract_strided_slice %3 {offsets = [0, 8], sizes = [16, 8], strides = [1, 1]} : vector<16x96xf32> to vector<16x8xf32>
    %25 = vector.shape_cast %24 : vector<16x8xf32> to vector<2x8x8xf32>
    %26 = vector.extract_strided_slice %3 {offsets = [0, 40], sizes = [16, 8], strides = [1, 1]} : vector<16x96xf32> to vector<16x8xf32>
    %27 = vector.shape_cast %26 : vector<16x8xf32> to vector<2x8x8xf32>
    %28 = vector.extract_strided_slice %3 {offsets = [0, 72], sizes = [16, 8], strides = [1, 1]} : vector<16x96xf32> to vector<16x8xf32>
    %29 = vector.shape_cast %28 : vector<16x8xf32> to vector<2x8x8xf32>
    "tpu.trace_start"() <{level = 10 : i32, message = "bqd,bkd->bqk"}> : () -> ()
    %cst_9 = arith.constant dense<0.000000e+00> : vector<2x8x8xf32>
    %30 = tpu.matmul %25, %27, %cst_9 {dimension_numbers = #tpu.dot_dimension_numbers<[2], [2], [1], [1], [0, 0, 0, 1, 1, 1], [0], [0]>} : vector<2x8x8xf32>, vector<2x8x8xf32>, vector<2x8x8xf32> -> vector<2x8x8xf32>
    "tpu.trace_stop"() : () -> ()
    %cst_10 = arith.constant dense<0xFF800000> : vector<2x8xf32>
    %31 = vector.multi_reduction <maximumf>, %30, %cst_10 [2] : vector<2x8x8xf32> to vector<2x8xf32>
    %32 = vector.shape_cast %31 : vector<2x8xf32> to vector<2x8x1xf32>
    %33 = vector.broadcast %32 : vector<2x8x1xf32> to vector<2x8x8xf32>
    %34 = arith.subf %30, %33 : vector<2x8x8xf32>
    %35 = math.exp %34 : vector<2x8x8xf32>
    %cst_11 = arith.constant dense<0.000000e+00> : vector<2x8xf32>
    %36 = vector.multi_reduction <add>, %35, %cst_11 [2] : vector<2x8x8xf32> to vector<2x8xf32>
    %37 = vector.shape_cast %36 : vector<2x8xf32> to vector<2x8x1xf32>
    "tpu.trace_start"() <{level = 10 : i32, message = "bqk,bkd->bqd"}> : () -> ()
    %cst_12 = arith.constant dense<0.000000e+00> : vector<2x8x8xf32>
    %38 = tpu.matmul %35, %29, %cst_12 {dimension_numbers = #tpu.dot_dimension_numbers<[2], [1], [1], [2], [0, 0, 0, 1, 1, 2], [0], [0]>} : vector<2x8x8xf32>, vector<2x8x8xf32>, vector<2x8x8xf32> -> vector<2x8x8xf32>
    "tpu.trace_stop"() : () -> ()
    %cst_13 = arith.constant 1.000000e+00 : f32
    %39 = vector.broadcast %cst_13 : f32 to vector<2x8x1xf32>
    %40 = arith.divf %39, %37 : vector<2x8x1xf32>
    %41 = vector.broadcast %40 : vector<2x8x1xf32> to vector<2x8x8xf32>
    %42 = arith.mulf %38, %41 : vector<2x8x8xf32>
    %43 = vector.shape_cast %42 : vector<2x8x8xf32> to vector<16x8xf32>
    %44 = vector.extract_strided_slice %3 {offsets = [0, 16], sizes = [16, 8], strides = [1, 1]} : vector<16x96xf32> to vector<16x8xf32>
    %45 = vector.shape_cast %44 : vector<16x8xf32> to vector<2x8x8xf32>
    %46 = vector.extract_strided_slice %3 {offsets = [0, 48], sizes = [16, 8], strides = [1, 1]} : vector<16x96xf32> to vector<16x8xf32>
    %47 = vector.shape_cast %46 : vector<16x8xf32> to vector<2x8x8xf32>
    %48 = vector.extract_strided_slice %3 {offsets = [0, 80], sizes = [16, 8], strides = [1, 1]} : vector<16x96xf32> to vector<16x8xf32>
    %49 = vector.shape_cast %48 : vector<16x8xf32> to vector<2x8x8xf32>
    "tpu.trace_start"() <{level = 10 : i32, message = "bqd,bkd->bqk"}> : () -> ()
    %cst_14 = arith.constant dense<0.000000e+00> : vector<2x8x8xf32>
    %50 = tpu.matmul %45, %47, %cst_14 {dimension_numbers = #tpu.dot_dimension_numbers<[2], [2], [1], [1], [0, 0, 0, 1, 1, 1], [0], [0]>} : vector<2x8x8xf32>, vector<2x8x8xf32>, vector<2x8x8xf32> -> vector<2x8x8xf32>
    "tpu.trace_stop"() : () -> ()
    %cst_15 = arith.constant dense<0xFF800000> : vector<2x8xf32>
    %51 = vector.multi_reduction <maximumf>, %50, %cst_15 [2] : vector<2x8x8xf32> to vector<2x8xf32>
    %52 = vector.shape_cast %51 : vector<2x8xf32> to vector<2x8x1xf32>
    %53 = vector.broadcast %52 : vector<2x8x1xf32> to vector<2x8x8xf32>
    %54 = arith.subf %50, %53 : vector<2x8x8xf32>
    %55 = math.exp %54 : vector<2x8x8xf32>
    %cst_16 = arith.constant dense<0.000000e+00> : vector<2x8xf32>
    %56 = vector.multi_reduction <add>, %55, %cst_16 [2] : vector<2x8x8xf32> to vector<2x8xf32>
    %57 = vector.shape_cast %56 : vector<2x8xf32> to vector<2x8x1xf32>
    "tpu.trace_start"() <{level = 10 : i32, message = "bqk,bkd->bqd"}> : () -> ()
    %cst_17 = arith.constant dense<0.000000e+00> : vector<2x8x8xf32>
    %58 = tpu.matmul %55, %49, %cst_17 {dimension_numbers = #tpu.dot_dimension_numbers<[2], [1], [1], [2], [0, 0, 0, 1, 1, 2], [0], [0]>} : vector<2x8x8xf32>, vector<2x8x8xf32>, vector<2x8x8xf32> -> vector<2x8x8xf32>
    "tpu.trace_stop"() : () -> ()
    %cst_18 = arith.constant 1.000000e+00 : f32
    %59 = vector.broadcast %cst_18 : f32 to vector<2x8x1xf32>
    %60 = arith.divf %59, %57 : vector<2x8x1xf32>
    %61 = vector.broadcast %60 : vector<2x8x1xf32> to vector<2x8x8xf32>
    %62 = arith.mulf %58, %61 : vector<2x8x8xf32>
    %63 = vector.shape_cast %62 : vector<2x8x8xf32> to vector<16x8xf32>
    %64 = vector.extract_strided_slice %3 {offsets = [0, 24], sizes = [16, 8], strides = [1, 1]} : vector<16x96xf32> to vector<16x8xf32>
    %65 = vector.shape_cast %64 : vector<16x8xf32> to vector<2x8x8xf32>
    %66 = vector.extract_strided_slice %3 {offsets = [0, 56], sizes = [16, 8], strides = [1, 1]} : vector<16x96xf32> to vector<16x8xf32>
    %67 = vector.shape_cast %66 : vector<16x8xf32> to vector<2x8x8xf32>
    %68 = vector.extract_strided_slice %3 {offsets = [0, 88], sizes = [16, 8], strides = [1, 1]} : vector<16x96xf32> to vector<16x8xf32>
    %69 = vector.shape_cast %68 : vector<16x8xf32> to vector<2x8x8xf32>
    "tpu.trace_start"() <{level = 10 : i32, message = "bqd,bkd->bqk"}> : () -> ()
    %cst_19 = arith.constant dense<0.000000e+00> : vector<2x8x8xf32>
    %70 = tpu.matmul %65, %67, %cst_19 {dimension_numbers = #tpu.dot_dimension_numbers<[2], [2], [1], [1], [0, 0, 0, 1, 1, 1], [0], [0]>} : vector<2x8x8xf32>, vector<2x8x8xf32>, vector<2x8x8xf32> -> vector<2x8x8xf32>
    "tpu.trace_stop"() : () -> ()
    %cst_20 = arith.constant dense<0xFF800000> : vector<2x8xf32>
    %71 = vector.multi_reduction <maximumf>, %70, %cst_20 [2] : vector<2x8x8xf32> to vector<2x8xf32>
    %72 = vector.shape_cast %71 : vector<2x8xf32> to vector<2x8x1xf32>
    %73 = vector.broadcast %72 : vector<2x8x1xf32> to vector<2x8x8xf32>
    %74 = arith.subf %70, %73 : vector<2x8x8xf32>
    %75 = math.exp %74 : vector<2x8x8xf32>
    %cst_21 = arith.constant dense<0.000000e+00> : vector<2x8xf32>
    %76 = vector.multi_reduction <add>, %75, %cst_21 [2] : vector<2x8x8xf32> to vector<2x8xf32>
    %77 = vector.shape_cast %76 : vector<2x8xf32> to vector<2x8x1xf32>
    "tpu.trace_start"() <{level = 10 : i32, message = "bqk,bkd->bqd"}> : () -> ()
    %cst_22 = arith.constant dense<0.000000e+00> : vector<2x8x8xf32>
    %78 = tpu.matmul %75, %69, %cst_22 {dimension_numbers = #tpu.dot_dimension_numbers<[2], [1], [1], [2], [0, 0, 0, 1, 1, 2], [0], [0]>} : vector<2x8x8xf32>, vector<2x8x8xf32>, vector<2x8x8xf32> -> vector<2x8x8xf32>
    "tpu.trace_stop"() : () -> ()
    %cst_23 = arith.constant 1.000000e+00 : f32
    %79 = vector.broadcast %cst_23 : f32 to vector<2x8x1xf32>
    %80 = arith.divf %79, %77 : vector<2x8x1xf32>
    %81 = vector.broadcast %80 : vector<2x8x1xf32> to vector<2x8x8xf32>
    %82 = arith.mulf %78, %81 : vector<2x8x8xf32>
    %83 = vector.shape_cast %82 : vector<2x8x8xf32> to vector<16x8xf32>
    %84 = tpu.concatenate %23, %43, %63, %83 in 1 : vector<16x8xf32>, vector<16x8xf32>, vector<16x8xf32>, vector<16x8xf32> -> vector<16x32xf32>
    %c0_24 = arith.constant 0 : index
    %c0_25 = arith.constant 0 : index
    %85 = vector.load %arg3[%c0_24, %c0_25] : memref<32x32xf32, #tpu.memory_space<vmem>>, vector<32x32xf32>
    %cst_26 = arith.constant dense<0.000000e+00> : vector<16x32xf32>
    %86 = tpu.matmul %84, %85, %cst_26 {dimension_numbers = #tpu.dot_dimension_numbers<[1], [0], [0], [1], [0, 0, 1, 1], [], []>} : vector<16x32xf32>, vector<32x32xf32>, vector<16x32xf32> -> vector<16x32xf32>
    %c0_27 = arith.constant 0 : index
    %c0_28 = arith.constant 0 : index
    %87 = vector.load %arg4[%c0_27, %c0_28] : memref<1x32xf32, #tpu.memory_space<vmem>>, vector<1x32xf32>
    %88 = vector.broadcast %87 : vector<1x32xf32> to vector<16x32xf32>
    %89 = arith.addf %86, %88 : vector<16x32xf32>
    %90 = vector.shape_cast %89 : vector<16x32xf32> to vector<2x8x32xf32>
    %c0_29 = arith.constant 0 : index
    %c0_30 = arith.constant 0 : index
    %c0_31 = arith.constant 0 : index
    %91 = vector.load %arg5[%c0_29, %c0_30, %c0_31] : memref<2x8x32xf32, #tpu.memory_space<vmem>>, vector<2x8x32xf32>
    tpu.vector_store %arg5[%c0_29, %c0_30, %c0_31], %90 {strides = array<i32>} : memref<2x8x32xf32, #tpu.memory_space<vmem>>, vector<2x8x32xf32>,
    return
  }
  func.func @transform_0(%arg0: i32) -> (i32, i32, i32) {
    %c0_i32 = arith.constant 0 : i32
    %c0_i32_0 = arith.constant 0 : i32
    %c0_i32_1 = arith.constant 0 : i32
    return %arg0, %c0_i32, %c0_i32_0 : i32, i32, i32
  }
  func.func @transform_1(%arg0: i32) -> (i32, i32) {
    %c0_i32 = arith.constant 0 : i32
    %c0_i32_0 = arith.constant 0 : i32
    %c0_i32_1 = arith.constant 0 : i32
    return %c0_i32, %c0_i32_0 : i32, i32
  }
  func.func @transform_2(%arg0: i32) -> (i32, i32) {
    %c0_i32 = arith.constant 0 : i32
    %c0_i32_0 = arith.constant 0 : i32
    %c0_i32_1 = arith.constant 0 : i32
    return %c0_i32, %c0_i32_0 : i32, i32
  }
  func.func @transform_3(%arg0: i32) -> (i32, i32) {
    %c0_i32 = arith.constant 0 : i32
    %c0_i32_0 = arith.constant 0 : i32
    %c0_i32_1 = arith.constant 0 : i32
    return %c0_i32, %c0_i32_0 : i32, i32
  }
  func.func @transform_4(%arg0: i32) -> (i32, i32, i32) {
    %c0_i32 = arith.constant 0 : i32
    %c0_i32_0 = arith.constant 0 : i32
    %c0_i32_1 = arith.constant 0 : i32
    return %arg0, %c0_i32, %c0_i32_0 : i32, i32, i32
  }
}

</mosaic_0001>

<llo_original>
// kernel: tpu_custom_call.1
$region0: #{tpu_custom_call.1}
  #allocation0 [shape = 'u32[]', space=smem, size = 0x4, offset = 0x4, fixed_abs, tag = 'smem constant byte address 0x4 - core index']
  #allocation1 [shape = 'u32[144,128]{1,0:T(1,128)}', space=vmem, size = 0x12000, scoped, tag = 'internal scratch']
  %s0 = inlined_call_operand.hbm [shape: f32[2,8,32], index: 0, kind: input, shape index: {}]
  %s1 = inlined_call_operand.hbm [shape: f32[32,96], index: 1, kind: input, shape index: {}]
  %s2 = inlined_call_operand.hbm [shape: f32[32,32], index: 2, kind: input, shape index: {}]
  %s3 = inlined_call_operand.vmem [shape: f32[1,32], index: 3, kind: input, shape index: {}]
  %s4 = inlined_call_operand.hbm [shape: f32[2,8,32], index: 4, kind: output, shape index: {}]
  %s5 = sld [smem:[#allocation0]]
  $region38: #{tpu_custom_call.1} parent=0
    _
  %s7 = ssub.s32 1, %s5
  %s8 = scalar_select 0, %s7, %s5
  $region1: #{tpu_custom_call.1} parent=0
    #allocation2 [shape = 'u8[8192]{0}', space=vmem, size = 0x2000, scoped, tag = 'input window, operand 0, single buffered']
    #allocation3 [shape = 's32[1]{0}', space=sflag, size = 0x4, scoped, tag = 'scoped memory for tpu_custom_call.1']
    #allocation4 [shape = 's32[1]{0}', space=sflag, size = 0x4, scoped, tag = 'scoped memory for tpu_custom_call.1']
    #allocation5 [shape = 'u8[16384]{0}', space=vmem, size = 0x4000, scoped, tag = 'input window, operand 1, single buffered']
    #allocation6 [shape = 's32[1]{0}', space=sflag, size = 0x4, scoped, tag = 'scoped memory for tpu_custom_call.1']
    #allocation7 [shape = 'u8[16384]{0}', space=vmem, size = 0x4000, scoped, tag = 'input window, operand 2, single buffered']
    #allocation8 [shape = 'u8[8192]{0}', space=vmem, size = 0x2000, scoped, tag = 'output window, operand 0, single buffered']
    %9 = vsyncpa [#allocation3], 0
    %10 = vsyncpa [#allocation6], 0
    %11 = vsyncpa [#allocation4], 0
    // Predicated region
    $region2: #{tpu_custom_call.1} parent=1 // pred_check
      _
    $region3: #{tpu_custom_call.1} parent=1 // pred_check_branch
      %13 = sbr.rel (0) target = $region5
    $region4: #{tpu_custom_call.1} parent=1 // pred_region
      %s15 = ssub.s32 256, 256
      %16 = vsyncadd [#allocation3], %s15
      %s17 = sshll.u32 [#allocation2], 4
      %s18 = int_to_ptr.vmem [resolvable:$true] %s17
      %23 = dma.hbm_to_vmem [thread:$0]  %s0, 256, %s18, [#allocation3], 128, 128, 8
    $region5: #{tpu_custom_call.1} parent=1 // pred_fallthru
      _
    // Predicated region
    $region6: #{tpu_custom_call.1} parent=1 // pred_check
      _
    $region7: #{tpu_custom_call.1} parent=1 // pred_check_branch
      %25 = sbr.rel (0) target = $region9
    $region8: #{tpu_custom_call.1} parent=1 // pred_region
      %s27 = ssub.s32 512, 512
      %28 = vsyncadd [#allocation6], %s27
      %s29 = sshll.u32 [#allocation5], 4
      %s30 = int_to_ptr.vmem [resolvable:$true] %s29
      %35 = dma.hbm_to_vmem [thread:$0]  %s1, 512, %s30, [#allocation6], 128, 128, 8
    $region9: #{tpu_custom_call.1} parent=1 // pred_fallthru
      _
    // Predicated region
    $region10: #{tpu_custom_call.1} parent=1 // pred_check
      _
    $region11: #{tpu_custom_call.1} parent=1 // pred_check_branch
      %37 = sbr.rel (0) target = $region13
    $region12: #{tpu_custom_call.1} parent=1 // pred_region
      %s39 = ssub.s32 512, 512
      %40 = vsyncadd [#allocation6], %s39
      %s41 = sshll.u32 [#allocation7], 4
      %s42 = int_to_ptr.vmem [resolvable:$true] %s41
      %47 = dma.hbm_to_vmem [thread:$0]  %s2, 512, %s42, [#allocation6], 128, 128, 8
    $region13: #{tpu_custom_call.1} parent=1 // pred_fallthru
      _
    // Predicated region
    $region14: #{tpu_custom_call.1} parent=1 // pred_check
      _
    $region15: #{tpu_custom_call.1} parent=1 // pred_check_branch
      %49 = sbr.rel (0) target = $region17
    $region16: #{tpu_custom_call.1} parent=1 // pred_region
      _
    $region17: #{tpu_custom_call.1} parent=1 // pred_fallthru
      _
    // Predicated region
    $region18: #{tpu_custom_call.1} parent=1 // pred_check
      _
    $region19: #{tpu_custom_call.1} parent=1 // pred_check_branch
      %51 = sbr.rel (0) target = $region21
    $region20: #{tpu_custom_call.1} parent=1 // pred_region
      %52 = dma.done [#allocation3], 256
    $region21: #{tpu_custom_call.1} parent=1 // pred_fallthru
      _
    // Predicated region
    $region22: #{tpu_custom_call.1} parent=1 // pred_check
      _
    $region23: #{tpu_custom_call.1} parent=1 // pred_check_branch
      %54 = sbr.rel (0) target = $region25
    $region24: #{tpu_custom_call.1} parent=1 // pred_region
      %55 = dma.done [#allocation6], 512
    $region25: #{tpu_custom_call.1} parent=1 // pred_fallthru
      _
    // Predicated region
    $region26: #{tpu_custom_call.1} parent=1 // pred_check
      _
    $region27: #{tpu_custom_call.1} parent=1 // pred_check_branch
      %57 = sbr.rel (0) target = $region29
    $region28: #{tpu_custom_call.1} parent=1 // pred_region
      %58 = dma.done [#allocation6], 512
    $region29: #{tpu_custom_call.1} parent=1 // pred_fallthru
      _
    %v59 = vld [vmem:[#allocation2] sm:$0xff]
    %v60 = vld [vmem:[#allocation2 + $0x8] sm:$0xff]
    %v61 = vld [vmem:[#allocation5] sm:$0xff]
    %v62 = vld [vmem:[#allocation5 + $0x8] sm:$0xff]
    %v63 = vld [vmem:[#allocation5 + $0x10] sm:$0xff]
    %v64 = vld [vmem:[#allocation5 + $0x18] sm:$0xff]
    %vm65 = vcmask 261120
    %v67 = vsel %vm65, %v59, 0
    %v70 = vsel %vm65, %v60, 0
    %72 = vmatprep.subr.mxu0 0.0
    %73 = vmatpush1.msra.mxu0 0.0
    %74 = vmatprep.subr.mxu0 0.0
    %75 = vmatpush1.msra.mxu0 0.0
    %76 = vmatprep.subr.mxu0 0.0
    %77 = vmatpush1.msra.mxu0 0.0
    %78 = vmatprep.subr.mxu0 0.0
    %79 = vmatpush1.msra.mxu0 0.0
    %80 = vmatprep.subr.mxu0 0.0
    %81 = vmatpush1.msra.mxu0 0.0
    %82 = vmatprep.subr.mxu0 0.0
    %83 = vmatpush1.msra.mxu0 0.0
    %84 = vmatprep.subr.mxu0 0.0
    %85 = vmatpush1.msra.mxu0 0.0
    %86 = vmatprep.subr.mxu0 0.0
    %87 = vmatpush1.msra.mxu0 0.0
    %88 = vmatprep.subr.mxu0 0.0
    %89 = vmatpush1.msra.mxu0 0.0
    %90 = vmatprep.subr.mxu0 0.0
    %91 = vmatpush1.msra.mxu0 0.0
    %92 = vmatprep.subr.mxu0 0.0
    %93 = vmatpush1.msra.mxu0 0.0
    %94 = vmatprep.subr.mxu0 0.0
    %95 = vmatpush1.msra.mxu0 0.0
    %96 = vmatprep.subr.mxu0 0.0
    %97 = vmatpush1.msra.mxu0 %v64
    %98 = vmatprep.subr.mxu0 0.0
    %99 = vmatpush1.msra.mxu0 %v63
    %100 = vmatprep.subr.mxu0 0.0
    %101 = vmatpush1.msra.mxu0 %v62
    %102 = vmatprep.subr.mxu0 0.0
    %103 = vmatpush1.msra.mxu0 %v61
    %104 = vmatprep.subr.mxu0 0.0
    %105 = vmatpush2.msra.mxu0 0.0
    %106 = vmatprep.subr.mxu0 0.0
    %107 = vmatpush2.msra.mxu0 0.0
    %108 = vmatprep.subr.mxu0 0.0
    %109 = vmatpush2.msra.mxu0 0.0
    %110 = vmatprep.subr.mxu0 0.0
    %111 = vmatpush2.msra.mxu0 0.0
    %112 = vmatprep.subr.mxu0 0.0
    %113 = vmatpush2.msra.mxu0 0.0
    %114 = vmatprep.subr.mxu0 0.0
    %115 = vmatpush2.msra.mxu0 0.0
    %116 = vmatprep.subr.mxu0 0.0
    %117 = vmatpush2.msra.mxu0 0.0
    %118 = vmatprep.subr.mxu0 0.0
    %119 = vmatpush2.msra.mxu0 0.0
    %120 = vmatprep.subr.mxu0 0.0
    %121 = vmatpush2.msra.mxu0 0.0
    %122 = vmatprep.subr.mxu0 0.0
    %123 = vmatpush2.msra.mxu0 0.0
    %124 = vmatprep.subr.mxu0 0.0
    %125 = vmatpush2.msra.mxu0 0.0
    %126 = vmatprep.subr.mxu0 0.0
    %127 = vmatpush2.msra.mxu0 0.0
    %128 = vmatprep.subr.mxu0 0.0
    %129 = vmatpush2.msra.mxu0 0.0
    %130 = vmatprep.subr.mxu0 0.0
    %131 = vmatpush2.msra.mxu0 0.0
    %132 = vmatprep.subr.mxu0 0.0
    %133 = vmatpush2.msra.mxu0 0.0
    %134 = vmatprep.subr.mxu0 0.0
    %135 = vmatpush2.msra.mxu0 0.0
    %136 = vmatprep.mubr.f32.mxu0 0.0
    %137 = vmatmul.mubr.f32.gmra.mxu0 %v67
    %v138 = vpop.f32.mrf.mxu0
    %v139 = vadd.f32 0.0, %v138
    %v140 = vpop.f32.mrf.mxu0
    %141 = vmatprep.mubr.f32.mxu0 0.0
    %142 = vmatmul.mubr.f32.gmra.mxu0 %v70
    %v143 = vpop.f32.mrf.mxu0
    %v144 = vadd.f32 0.0, %v143
    %v145 = vpop.f32.mrf.mxu0
    %146 = vdwg.mxu0
    %148 = vrot.lane.b32.xlu0 %v139, 96
    %v149 = vpop.permute.xlu0 %148
    %vm150 = vcmask 64512
    %v151 = vsel %vm150, %v139, 0
    %v153 = vsel %vm150, %v149, 0
    %155 = vmatprep.subr.mxu0 0.0
    %156 = vmatpush1.xpose.msra.mxu0 0.0
    %157 = vmatprep.subr.mxu0 0.0
    %158 = vmatpush1.xpose.msra.mxu0 0.0
    %159 = vmatprep.subr.mxu0 0.0
    %160 = vmatpush1.xpose.msra.mxu0 0.0
    %161 = vmatprep.subr.mxu0 0.0
    %162 = vmatpush1.xpose.msra.mxu0 0.0
    %163 = vmatprep.subr.mxu0 0.0
    %164 = vmatpush1.xpose.msra.mxu0 0.0
    %165 = vmatprep.subr.mxu0 0.0
    %166 = vmatpush1.xpose.msra.mxu0 0.0
    %167 = vmatprep.subr.mxu0 0.0
    %168 = vmatpush1.xpose.msra.mxu0 0.0
    %169 = vmatprep.subr.mxu0 0.0
    %170 = vmatpush1.xpose.msra.mxu0 0.0
    %171 = vmatprep.subr.mxu0 0.0
    %172 = vmatpush1.xpose.msra.mxu0 0.0
    %173 = vmatprep.subr.mxu0 0.0
    %174 = vmatpush1.xpose.msra.mxu0 0.0
    %175 = vmatprep.subr.mxu0 0.0
    %176 = vmatpush1.xpose.msra.mxu0 0.0
    %177 = vmatprep.subr.mxu0 0.0
    %178 = vmatpush1.xpose.msra.mxu0 0.0
    %179 = vmatprep.subr.mxu0 0.0
    %180 = vmatpush1.xpose.msra.mxu0 0.0
    %181 = vmatprep.subr.mxu0 0.0
    %182 = vmatpush1.xpose.msra.mxu0 0.0
    %183 = vmatprep.subr.mxu0 0.0
    %184 = vmatpush1.xpose.msra.mxu0 0.0
    %185 = vmatprep.subr.mxu0 0.0
    %186 = vmatpush1.xpose.msra.mxu0 %v153
    %187 = vmatprep.subr.mxu0 0.0
    %188 = vmatpush2.xpose.msra.mxu0 0.0
    %189 = vmatprep.subr.mxu0 0.0
    %190 = vmatpush2.xpose.msra.mxu0 0.0
    %191 = vmatprep.subr.mxu0 0.0
    %192 = vmatpush2.xpose.msra.mxu0 0.0
    %193 = vmatprep.subr.mxu0 0.0
    %194 = vmatpush2.xpose.msra.mxu0 0.0
    %195 = vmatprep.subr.mxu0 0.0
    %196 = vmatpush2.xpose.msra.mxu0 0.0
    %197 = vmatprep.subr.mxu0 0.0
    %198 = vmatpush2.xpose.msra.mxu0 0.0
    %199 = vmatprep.subr.mxu0 0.0
    %200 = vmatpush2.xpose.msra.mxu0 0.0
    %201 = vmatprep.subr.mxu0 0.0
    %202 = vmatpush2.xpose.msra.mxu0 0.0
    %203 = vmatprep.subr.mxu0 0.0
    %204 = vmatpush2.xpose.msra.mxu0 0.0
    %205 = vmatprep.subr.mxu0 0.0
    %206 = vmatpush2.xpose.msra.mxu0 0.0
    %207 = vmatprep.subr.mxu0 0.0
    %208 = vmatpush2.xpose.msra.mxu0 0.0
    %209 = vmatprep.subr.mxu0 0.0
    %210 = vmatpush2.xpose.msra.mxu0 0.0
    %211 = vmatprep.subr.mxu0 0.0
    %212 = vmatpush2.xpose.msra.mxu0 0.0
    %213 = vmatprep.subr.mxu0 0.0
    %214 = vmatpush2.xpose.msra.mxu0 0.0
    %215 = vmatprep.subr.mxu0 0.0
    %216 = vmatpush2.xpose.msra.mxu0 0.0
    %217 = vmatprep.subr.mxu0 0.0
    %218 = vmatpush2.xpose.msra.mxu0 0.0
    %219 = vmatprep.mubr.f32.mxu0 0.0
    %220 = vmatmul.mubr.f32.gmra.mxu0 %v151
    %v221 = vpop.f32.mrf.mxu0
    %v222 = vadd.f32 0.0, %v221
    %v223 = vpop.f32.mrf.mxu0
    %224 = vdwg.mxu0
    %226 = vrot.lane.b32.xlu0 %v144, 96
    %v227 = vpop.permute.xlu0 %226
    %v228 = vsel %vm150, %v144, 0
    %v230 = vsel %vm150, %v227, 0
    %232 = vmatprep.subr.mxu0 0.0
    %233 = vmatpush1.xpose.msra.mxu0 0.0
    %234 = vmatprep.subr.mxu0 0.0
    %235 = vmatpush1.xpose.msra.mxu0 0.0
    %236 = vmatprep.subr.mxu0 0.0
    %237 = vmatpush1.xpose.msra.mxu0 0.0
    %238 = vmatprep.subr.mxu0 0.0
    %239 = vmatpush1.xpose.msra.mxu0 0.0
    %240 = vmatprep.subr.mxu0 0.0
    %241 = vmatpush1.xpose.msra.mxu0 0.0
    %242 = vmatprep.subr.mxu0 0.0
    %243 = vmatpush1.xpose.msra.mxu0 0.0
    %244 = vmatprep.subr.mxu0 0.0
    %245 = vmatpush1.xpose.msra.mxu0 0.0
    %246 = vmatprep.subr.mxu0 0.0
    %247 = vmatpush1.xpose.msra.mxu0 0.0
    %248 = vmatprep.subr.mxu0 0.0
    %249 = vmatpush1.xpose.msra.mxu0 0.0
    %250 = vmatprep.subr.mxu0 0.0
    %251 = vmatpush1.xpose.msra.mxu0 0.0
    %252 = vmatprep.subr.mxu0 0.0
    %253 = vmatpush1.xpose.msra.mxu0 0.0
    %254 = vmatprep.subr.mxu0 0.0
    %255 = vmatpush1.xpose.msra.mxu0 0.0
    %256 = vmatprep.subr.mxu0 0.0
    %257 = vmatpush1.xpose.msra.mxu0 0.0
    %258 = vmatprep.subr.mxu0 0.0
    %259 = vmatpush1.xpose.msra.mxu0 0.0
    %260 = vmatprep.subr.mxu0 0.0
    %261 = vmatpush1.xpose.msra.mxu0 0.0
    %262 = vmatprep.subr.mxu0 0.0
    %263 = vmatpush1.xpose.msra.mxu0 %v230
    %264 = vmatprep.subr.mxu0 0.0
    %265 = vmatpush2.xpose.msra.mxu0 0.0
    %266 = vmatprep.subr.mxu0 0.0
    %267 = vmatpush2.xpose.msra.mxu0 0.0
    %268 = vmatprep.subr.mxu0 0.0
    %269 = vmatpush2.xpose.msra.mxu0 0.0
    %270 = vmatprep.subr.mxu0 0.0
    %271 = vmatpush2.xpose.msra.mxu0 0.0
    %272 = vmatprep.subr.mxu0 0.0
    %273 = vmatpush2.xpose.msra.mxu0 0.0
    %274 = vmatprep.subr.mxu0 0.0
    %275 = vmatpush2.xpose.msra.mxu0 0.0
    %276 = vmatprep.subr.mxu0 0.0
    %277 = vmatpush2.xpose.msra.mxu0 0.0
    %278 = vmatprep.subr.mxu0 0.0
    %279 = vmatpush2.xpose.msra.mxu0 0.0
    %280 = vmatprep.subr.mxu0 0.0
    %281 = vmatpush2.xpose.msra.mxu0 0.0
    %282 = vmatprep.subr.mxu0 0.0
    %283 = vmatpush2.xpose.msra.mxu0 0.0
    %284 = vmatprep.subr.mxu0 0.0
    %285 = vmatpush2.xpose.msra.mxu0 0.0
    %286 = vmatprep.subr.mxu0 0.0
    %287 = vmatpush2.xpose.msra.mxu0 0.0
    %288 = vmatprep.subr.mxu0 0.0
    %289 = vmatpush2.xpose.msra.mxu0 0.0
    %290 = vmatprep.subr.mxu0 0.0
    %291 = vmatpush2.xpose.msra.mxu0 0.0
    %292 = vmatprep.subr.mxu0 0.0
    %293 = vmatpush2.xpose.msra.mxu0 0.0
    %294 = vmatprep.subr.mxu0 0.0
    %295 = vmatpush2.xpose.msra.mxu0 0.0
    %296 = vmatprep.mubr.f32.mxu0 0.0
    %297 = vmatmul.mubr.f32.gmra.mxu0 %v228
    %v298 = vpop.f32.mrf.mxu0
    %v299 = vadd.f32 0.0, %v298
    %v300 = vpop.f32.mrf.mxu0
    %301 = vdwg.mxu0
    %v302 = vsel %vm150, %v222, -inf
    %303 = vmax.xlane.f32.xlu0 %v302
    %v304 = vpop.xlane.xlu0 %303
    %v305 = vsel %vm150, %v299, -inf
    %306 = vmax.xlane.f32.xlu0 %v305
    %v307 = vpop.xlane.xlu0 %306
    %v308 = vsub.f32 %v222, %v304
    %v309 = vsub.f32 %v299, %v307
    %v310 = vmul.f32 %v308, 1.442695
    %v311 = vpow.pop %v310
    %v312 = vmul.f32 %v309, 1.442695
    %v313 = vpow.pop %v312
    %v314 = vsel %vm150, %v311, 0.0
    %315 = vadd.xlane.f32.xlu0 %v314
    %v316 = vpop.xlane.xlu0 %315
    %v317 = vsel %vm150, %v313, 0.0
    %318 = vadd.xlane.f32.xlu0 %v317
    %v319 = vpop.xlane.xlu0 %318
    %320 = vrot.lane.b32.xlu0 %v139, 64
    %v321 = vpop.permute.xlu0 %320
    %v324 = vsel %vm150, %v311, 0
    %326 = vmatprep.subr.mxu0 0.0
    %327 = vmatpush1.msra.mxu0 0.0
    %328 = vmatprep.subr.mxu0 0.0
    %329 = vmatpush1.msra.mxu0 0.0
    %330 = vmatprep.subr.mxu0 0.0
    %331 = vmatpush1.msra.mxu0 0.0
    %332 = vmatprep.subr.mxu0 0.0
    %333 = vmatpush1.msra.mxu0 0.0
    %334 = vmatprep.subr.mxu0 0.0
    %335 = vmatpush1.msra.mxu0 0.0
    %336 = vmatprep.subr.mxu0 0.0
    %337 = vmatpush1.msra.mxu0 0.0
    %338 = vmatprep.subr.mxu0 0.0
    %339 = vmatpush1.msra.mxu0 0.0
    %340 = vmatprep.subr.mxu0 0.0
    %341 = vmatpush1.msra.mxu0 0.0
    %342 = vmatprep.subr.mxu0 0.0
    %343 = vmatpush1.msra.mxu0 0.0
    %344 = vmatprep.subr.mxu0 0.0
    %345 = vmatpush1.msra.mxu0 0.0
    %346 = vmatprep.subr.mxu0 0.0
    %347 = vmatpush1.msra.mxu0 0.0
    %348 = vmatprep.subr.mxu0 0.0
    %349 = vmatpush1.msra.mxu0 0.0
    %350 = vmatprep.subr.mxu0 0.0
    %351 = vmatpush1.msra.mxu0 0.0
    %352 = vmatprep.subr.mxu0 0.0
    %353 = vmatpush1.msra.mxu0 0.0
    %354 = vmatprep.subr.mxu0 0.0
    %355 = vmatpush1.msra.mxu0 0.0
    %356 = vmatprep.subr.mxu0 0.0
    %357 = vmatpush1.msra.mxu0 %v321
    %358 = vmatprep.subr.mxu0 0.0
    %359 = vmatpush2.msra.mxu0 0.0
    %360 = vmatprep.subr.mxu0 0.0
    %361 = vmatpush2.msra.mxu0 0.0
    %362 = vmatprep.subr.mxu0 0.0
    %363 = vmatpush2.msra.mxu0 0.0
    %364 = vmatprep.subr.mxu0 0.0
    %365 = vmatpush2.msra.mxu0 0.0
    %366 = vmatprep.subr.mxu0 0.0
    %367 = vmatpush2.msra.mxu0 0.0
    %368 = vmatprep.subr.mxu0 0.0
    %369 = vmatpush2.msra.mxu0 0.0
    %370 = vmatprep.subr.mxu0 0.0
    %371 = vmatpush2.msra.mxu0 0.0
    %372 = vmatprep.subr.mxu0 0.0
    %373 = vmatpush2.msra.mxu0 0.0
    %374 = vmatprep.subr.mxu0 0.0
    %375 = vmatpush2.msra.mxu0 0.0
    %376 = vmatprep.subr.mxu0 0.0
    %377 = vmatpush2.msra.mxu0 0.0
    %378 = vmatprep.subr.mxu0 0.0
    %379 = vmatpush2.msra.mxu0 0.0
    %380 = vmatprep.subr.mxu0 0.0
    %381 = vmatpush2.msra.mxu0 0.0
    %382 = vmatprep.subr.mxu0 0.0
    %383 = vmatpush2.msra.mxu0 0.0
    %384 = vmatprep.subr.mxu0 0.0
    %385 = vmatpush2.msra.mxu0 0.0
    %386 = vmatprep.subr.mxu0 0.0
    %387 = vmatpush2.msra.mxu0 0.0
    %388 = vmatprep.subr.mxu0 0.0
    %389 = vmatpush2.msra.mxu0 0.0
    %390 = vmatprep.mubr.f32.mxu0 0.0
    %391 = vmatmul.mubr.f32.gmra.mxu0 %v324
    %v392 = vpop.f32.mrf.mxu0
    %v393 = vadd.f32 0.0, %v392
    %v394 = vpop.f32.mrf.mxu0
    %395 = vdwg.mxu0
    %396 = vrot.lane.b32.xlu0 %v144, 64
    %v397 = vpop.permute.xlu0 %396
    %v400 = vsel %vm150, %v313, 0
    %402 = vmatprep.subr.mxu0 0.0
    %403 = vmatpush1.msra.mxu0 0.0
    %404 = vmatprep.subr.mxu0 0.0
    %405 = vmatpush1.msra.mxu0 0.0
    %406 = vmatprep.subr.mxu0 0.0
    %407 = vmatpush1.msra.mxu0 0.0
    %408 = vmatprep.subr.mxu0 0.0
    %409 = vmatpush1.msra.mxu0 0.0
    %410 = vmatprep.subr.mxu0 0.0
    %411 = vmatpush1.msra.mxu0 0.0
    %412 = vmatprep.subr.mxu0 0.0
    %413 = vmatpush1.msra.mxu0 0.0
    %414 = vmatprep.subr.mxu0 0.0
    %415 = vmatpush1.msra.mxu0 0.0
    %416 = vmatprep.subr.mxu0 0.0
    %417 = vmatpush1.msra.mxu0 0.0
    %418 = vmatprep.subr.mxu0 0.0
    %419 = vmatpush1.msra.mxu0 0.0
    %420 = vmatprep.subr.mxu0 0.0
    %421 = vmatpush1.msra.mxu0 0.0
    %422 = vmatprep.subr.mxu0 0.0
    %423 = vmatpush1.msra.mxu0 0.0
    %424 = vmatprep.subr.mxu0 0.0
    %425 = vmatpush1.msra.mxu0 0.0
    %426 = vmatprep.subr.mxu0 0.0
    %427 = vmatpush1.msra.mxu0 0.0
    %428 = vmatprep.subr.mxu0 0.0
    %429 = vmatpush1.msra.mxu0 0.0
    %430 = vmatprep.subr.mxu0 0.0
    %431 = vmatpush1.msra.mxu0 0.0
    %432 = vmatprep.subr.mxu0 0.0
    %433 = vmatpush1.msra.mxu0 %v397
    %434 = vmatprep.subr.mxu0 0.0
    %435 = vmatpush2.msra.mxu0 0.0
    %436 = vmatprep.subr.mxu0 0.0
    %437 = vmatpush2.msra.mxu0 0.0
    %438 = vmatprep.subr.mxu0 0.0
    %439 = vmatpush2.msra.mxu0 0.0
    %440 = vmatprep.subr.mxu0 0.0
    %441 = vmatpush2.msra.mxu0 0.0
    %442 = vmatprep.subr.mxu0 0.0
    %443 = vmatpush2.msra.mxu0 0.0
    %444 = vmatprep.subr.mxu0 0.0
    %445 = vmatpush2.msra.mxu0 0.0
    %446 = vmatprep.subr.mxu0 0.0
    %447 = vmatpush2.msra.mxu0 0.0
    %448 = vmatprep.subr.mxu0 0.0
    %449 = vmatpush2.msra.mxu0 0.0
    %450 = vmatprep.subr.mxu0 0.0
    %451 = vmatpush2.msra.mxu0 0.0
    %452 = vmatprep.subr.mxu0 0.0
    %453 = vmatpush2.msra.mxu0 0.0
    %454 = vmatprep.subr.mxu0 0.0
    %455 = vmatpush2.msra.mxu0 0.0
    %456 = vmatprep.subr.mxu0 0.0
    %457 = vmatpush2.msra.mxu0 0.0
    %458 = vmatprep.subr.mxu0 0.0
    %459 = vmatpush2.msra.mxu0 0.0
    %460 = vmatprep.subr.mxu0 0.0
    %461 = vmatpush2.msra.mxu0 0.0
    %462 = vmatprep.subr.mxu0 0.0
    %463 = vmatpush2.msra.mxu0 0.0
    %464 = vmatprep.subr.mxu0 0.0
    %465 = vmatpush2.msra.mxu0 0.0
    %466 = vmatprep.mubr.f32.mxu0 0.0
    %467 = vmatmul.mubr.f32.gmra.mxu0 %v400
    %v468 = vpop.f32.mrf.mxu0
    %v469 = vadd.f32 0.0, %v468
    %v470 = vpop.f32.mrf.mxu0
    %471 = vdwg.mxu0
    %v472 = vrcp.pop %v316
    %v473 = vmul.f32 1.0, %v472
    %v474 = vrcp.pop %v319
    %v475 = vmul.f32 1.0, %v474
    %v476 = vmul.f32 %v393, %v473
    %v477 = vmul.f32 %v469, %v475
    %478 = vrot.lane.b32.xlu0 %v139, 120
    %v479 = vpop.permute.xlu0 %478
    %480 = vrot.lane.b32.xlu0 %v139, 88
    %v481 = vpop.permute.xlu0 %480
    %v482 = vsel %vm150, %v479, 0
    %v484 = vsel %vm150, %v481, 0
    %486 = vmatprep.subr.mxu0 0.0
    %487 = vmatpush1.xpose.msra.mxu0 0.0
    %488 = vmatprep.subr.mxu0 0.0
    %489 = vmatpush1.xpose.msra.mxu0 0.0
    %490 = vmatprep.subr.mxu0 0.0
    %491 = vmatpush1.xpose.msra.mxu0 0.0
    %492 = vmatprep.subr.mxu0 0.0
    %493 = vmatpush1.xpose.msra.mxu0 0.0
    %494 = vmatprep.subr.mxu0 0.0
    %495 = vmatpush1.xpose.msra.mxu0 0.0
    %496 = vmatprep.subr.mxu0 0.0
    %497 = vmatpush1.xpose.msra.mxu0 0.0
    %498 = vmatprep.subr.mxu0 0.0
    %499 = vmatpush1.xpose.msra.mxu0 0.0
    %500 = vmatprep.subr.mxu0 0.0
    %501 = vmatpush1.xpose.msra.mxu0 0.0
    %502 = vmatprep.subr.mxu0 0.0
    %503 = vmatpush1.xpose.msra.mxu0 0.0
    %504 = vmatprep.subr.mxu0 0.0
    %505 = vmatpush1.xpose.msra.mxu0 0.0
    %506 = vmatprep.subr.mxu0 0.0
    %507 = vmatpush1.xpose.msra.mxu0 0.0
    %508 = vmatprep.subr.mxu0 0.0
    %509 = vmatpush1.xpose.msra.mxu0 0.0
    %510 = vmatprep.subr.mxu0 0.0
    %511 = vmatpush1.xpose.msra.mxu0 0.0
    %512 = vmatprep.subr.mxu0 0.0
    %513 = vmatpush1.xpose.msra.mxu0 0.0
    %514 = vmatprep.subr.mxu0 0.0
    %515 = vmatpush1.xpose.msra.mxu0 0.0
    %516 = vmatprep.subr.mxu0 0.0
    %517 = vmatpush1.xpose.msra.mxu0 %v484
    %518 = vmatprep.subr.mxu0 0.0
    %519 = vmatpush2.xpose.msra.mxu0 0.0
    %520 = vmatprep.subr.mxu0 0.0
    %521 = vmatpush2.xpose.msra.mxu0 0.0
    %522 = vmatprep.subr.mxu0 0.0
    %523 = vmatpush2.xpose.msra.mxu0 0.0
    %524 = vmatprep.subr.mxu0 0.0
    %525 = vmatpush2.xpose.msra.mxu0 0.0
    %526 = vmatprep.subr.mxu0 0.0
    %527 = vmatpush2.xpose.msra.mxu0 0.0
    %528 = vmatprep.subr.mxu0 0.0
    %529 = vmatpush2.xpose.msra.mxu0 0.0
    %530 = vmatprep.subr.mxu0 0.0
    %531 = vmatpush2.xpose.msra.mxu0 0.0
    %532 = vmatprep.subr.mxu0 0.0
    %533 = vmatpush2.xpose.msra.mxu0 0.0
    %534 = vmatprep.subr.mxu0 0.0
    %535 = vmatpush2.xpose.msra.mxu0 0.0
    %536 = vmatprep.subr.mxu0 0.0
    %537 = vmatpush2.xpose.msra.mxu0 0.0
    %538 = vmatprep.subr.mxu0 0.0
    %539 = vmatpush2.xpose.msra.mxu0 0.0
    %540 = vmatprep.subr.mxu0 0.0
    %541 = vmatpush2.xpose.msra.mxu0 0.0
    %542 = vmatprep.subr.mxu0 0.0
    %543 = vmatpush2.xpose.msra.mxu0 0.0
    %544 = vmatprep.subr.mxu0 0.0
    %545 = vmatpush2.xpose.msra.mxu0 0.0
    %546 = vmatprep.subr.mxu0 0.0
    %547 = vmatpush2.xpose.msra.mxu0 0.0
    %548 = vmatprep.subr.mxu0 0.0
    %549 = vmatpush2.xpose.msra.mxu0 0.0
    %550 = vmatprep.mubr.f32.mxu0 0.0
    %551 = vmatmul.mubr.f32.gmra.mxu0 %v482
    %v552 = vpop.f32.mrf.mxu0
    %v553 = vadd.f32 0.0, %v552
    %v554 = vpop.f32.mrf.mxu0
    %555 = vdwg.mxu0
    %556 = vrot.lane.b32.xlu0 %v144, 120
    %v557 = vpop.permute.xlu0 %556
    %558 = vrot.lane.b32.xlu0 %v144, 88
    %v559 = vpop.permute.xlu0 %558
    %v560 = vsel %vm150, %v557, 0
    %v562 = vsel %vm150, %v559, 0
    %564 = vmatprep.subr.mxu0 0.0
    %565 = vmatpush1.xpose.msra.mxu0 0.0
    %566 = vmatprep.subr.mxu0 0.0
    %567 = vmatpush1.xpose.msra.mxu0 0.0
    %568 = vmatprep.subr.mxu0 0.0
    %569 = vmatpush1.xpose.msra.mxu0 0.0
    %570 = vmatprep.subr.mxu0 0.0
    %571 = vmatpush1.xpose.msra.mxu0 0.0
    %572 = vmatprep.subr.mxu0 0.0
    %573 = vmatpush1.xpose.msra.mxu0 0.0
    %574 = vmatprep.subr.mxu0 0.0
    %575 = vmatpush1.xpose.msra.mxu0 0.0
    %576 = vmatprep.subr.mxu0 0.0
    %577 = vmatpush1.xpose.msra.mxu0 0.0
    %578 = vmatprep.subr.mxu0 0.0
    %579 = vmatpush1.xpose.msra.mxu0 0.0
    %580 = vmatprep.subr.mxu0 0.0
    %581 = vmatpush1.xpose.msra.mxu0 0.0
    %582 = vmatprep.subr.mxu0 0.0
    %583 = vmatpush1.xpose.msra.mxu0 0.0
    %584 = vmatprep.subr.mxu0 0.0
    %585 = vmatpush1.xpose.msra.mxu0 0.0
    %586 = vmatprep.subr.mxu0 0.0
    %587 = vmatpush1.xpose.msra.mxu0 0.0
    %588 = vmatprep.subr.mxu0 0.0
    %589 = vmatpush1.xpose.msra.mxu0 0.0
    %590 = vmatprep.subr.mxu0 0.0
    %591 = vmatpush1.xpose.msra.mxu0 0.0
    %592 = vmatprep.subr.mxu0 0.0
    %593 = vmatpush1.xpose.msra.mxu0 0.0
    %594 = vmatprep.subr.mxu0 0.0
    %595 = vmatpush1.xpose.msra.mxu0 %v562
    %596 = vmatprep.subr.mxu0 0.0
    %597 = vmatpush2.xpose.msra.mxu0 0.0
    %598 = vmatprep.subr.mxu0 0.0
    %599 = vmatpush2.xpose.msra.mxu0 0.0
    %600 = vmatprep.subr.mxu0 0.0
    %601 = vmatpush2.xpose.msra.mxu0 0.0
    %602 = vmatprep.subr.mxu0 0.0
    %603 = vmatpush2.xpose.msra.mxu0 0.0
    %604 = vmatprep.subr.mxu0 0.0
    %605 = vmatpush2.xpose.msra.mxu0 0.0
    %606 = vmatprep.subr.mxu0 0.0
    %607 = vmatpush2.xpose.msra.mxu0 0.0
    %608 = vmatprep.subr.mxu0 0.0
    %609 = vmatpush2.xpose.msra.mxu0 0.0
    %610 = vmatprep.subr.mxu0 0.0
    %611 = vmatpush2.xpose.msra.mxu0 0.0
    %612 = vmatprep.subr.mxu0 0.0
    %613 = vmatpush2.xpose.msra.mxu0 0.0
    %614 = vmatprep.subr.mxu0 0.0
    %615 = vmatpush2.xpose.msra.mxu0 0.0
    %616 = vmatprep.subr.mxu0 0.0
    %617 = vmatpush2.xpose.msra.mxu0 0.0
    %618 = vmatprep.subr.mxu0 0.0
    %619 = vmatpush2.xpose.msra.mxu0 0.0
    %620 = vmatprep.subr.mxu0 0.0
    %621 = vmatpush2.xpose.msra.mxu0 0.0
    %622 = vmatprep.subr.mxu0 0.0
    %623 = vmatpush2.xpose.msra.mxu0 0.0
    %624 = vmatprep.subr.mxu0 0.0
    %625 = vmatpush2.xpose.msra.mxu0 0.0
    %626 = vmatprep.subr.mxu0 0.0
    %627 = vmatpush2.xpose.msra.mxu0 0.0
    %628 = vmatprep.mubr.f32.mxu0 0.0
    %629 = vmatmul.mubr.f32.gmra.mxu0 %v560
    %v630 = vpop.f32.mrf.mxu0
    %v631 = vadd.f32 0.0, %v630
    %v632 = vpop.f32.mrf.mxu0
    %633 = vdwg.mxu0
    %v634 = vsel %vm150, %v553, -inf
    %635 = vmax.xlane.f32.xlu0 %v634
    %v636 = vpop.xlane.xlu0 %635
    %v637 = vsel %vm150, %v631, -inf
    %638 = vmax.xlane.f32.xlu0 %v637
    %v639 = vpop.xlane.xlu0 %638
    %v640 = vsub.f32 %v553, %v636
    %v641 = vsub.f32 %v631, %v639
    %v642 = vmul.f32 %v640, 1.442695
    %v643 = vpow.pop %v642
    %v644 = vmul.f32 %v641, 1.442695
    %v645 = vpow.pop %v644
    %v646 = vsel %vm150, %v643, 0.0
    %647 = vadd.xlane.f32.xlu0 %v646
    %v648 = vpop.xlane.xlu0 %647
    %v649 = vsel %vm150, %v645, 0.0
    %650 = vadd.xlane.f32.xlu0 %v649
    %v651 = vpop.xlane.xlu0 %650
    %652 = vrot.lane.b32.xlu0 %v139, 56
    %v653 = vpop.permute.xlu0 %652
    %v656 = vsel %vm150, %v643, 0
    %658 = vmatprep.subr.mxu0 0.0
    %659 = vmatpush1.msra.mxu0 0.0
    %660 = vmatprep.subr.mxu0 0.0
    %661 = vmatpush1.msra.mxu0 0.0
    %662 = vmatprep.subr.mxu0 0.0
    %663 = vmatpush1.msra.mxu0 0.0
    %664 = vmatprep.subr.mxu0 0.0
    %665 = vmatpush1.msra.mxu0 0.0
    %666 = vmatprep.subr.mxu0 0.0
    %667 = vmatpush1.msra.mxu0 0.0
    %668 = vmatprep.subr.mxu0 0.0
    %669 = vmatpush1.msra.mxu0 0.0
    %670 = vmatprep.subr.mxu0 0.0
    %671 = vmatpush1.msra.mxu0 0.0
    %672 = vmatprep.subr.mxu0 0.0
    %673 = vmatpush1.msra.mxu0 0.0
    %674 = vmatprep.subr.mxu0 0.0
    %675 = vmatpush1.msra.mxu0 0.0
    %676 = vmatprep.subr.mxu0 0.0
    %677 = vmatpush1.msra.mxu0 0.0
    %678 = vmatprep.subr.mxu0 0.0
    %679 = vmatpush1.msra.mxu0 0.0
    %680 = vmatprep.subr.mxu0 0.0
    %681 = vmatpush1.msra.mxu0 0.0
    %682 = vmatprep.subr.mxu0 0.0
    %683 = vmatpush1.msra.mxu0 0.0
    %684 = vmatprep.subr.mxu0 0.0
    %685 = vmatpush1.msra.mxu0 0.0
    %686 = vmatprep.subr.mxu0 0.0
    %687 = vmatpush1.msra.mxu0 0.0
    %688 = vmatprep.subr.mxu0 0.0
    %689 = vmatpush1.msra.mxu0 %v653
    %690 = vmatprep.subr.mxu0 0.0
    %691 = vmatpush2.msra.mxu0 0.0
    %692 = vmatprep.subr.mxu0 0.0
    %693 = vmatpush2.msra.mxu0 0.0
    %694 = vmatprep.subr.mxu0 0.0
    %695 = vmatpush2.msra.mxu0 0.0
    %696 = vmatprep.subr.mxu0 0.0
    %697 = vmatpush2.msra.mxu0 0.0
    %698 = vmatprep.subr.mxu0 0.0
    %699 = vmatpush2.msra.mxu0 0.0
    %700 = vmatprep.subr.mxu0 0.0
    %701 = vmatpush2.msra.mxu0 0.0
    %702 = vmatprep.subr.mxu0 0.0
    %703 = vmatpush2.msra.mxu0 0.0
    %704 = vmatprep.subr.mxu0 0.0
    %705 = vmatpush2.msra.mxu0 0.0
    %706 = vmatprep.subr.mxu0 0.0
    %707 = vmatpush2.msra.mxu0 0.0
    %708 = vmatprep.subr.mxu0 0.0
    %709 = vmatpush2.msra.mxu0 0.0
    %710 = vmatprep.subr.mxu0 0.0
    %711 = vmatpush2.msra.mxu0 0.0
    %712 = vmatprep.subr.mxu0 0.0
    %713 = vmatpush2.msra.mxu0 0.0
    %714 = vmatprep.subr.mxu0 0.0
    %715 = vmatpush2.msra.mxu0 0.0
    %716 = vmatprep.subr.mxu0 0.0
    %717 = vmatpush2.msra.mxu0 0.0
    %718 = vmatprep.subr.mxu0 0.0
    %719 = vmatpush2.msra.mxu0 0.0
    %720 = vmatprep.subr.mxu0 0.0
    %721 = vmatpush2.msra.mxu0 0.0
    %722 = vmatprep.mubr.f32.mxu0 0.0
    %723 = vmatmul.mubr.f32.gmra.mxu0 %v656
    %v724 = vpop.f32.mrf.mxu0
    %v725 = vadd.f32 0.0, %v724
    %v726 = vpop.f32.mrf.mxu0
    %727 = vdwg.mxu0
    %728 = vrot.lane.b32.xlu0 %v144, 56
    %v729 = vpop.permute.xlu0 %728
    %v732 = vsel %vm150, %v645, 0
    %734 = vmatprep.subr.mxu0 0.0
    %735 = vmatpush1.msra.mxu0 0.0
    %736 = vmatprep.subr.mxu0 0.0
    %737 = vmatpush1.msra.mxu0 0.0
    %738 = vmatprep.subr.mxu0 0.0
    %739 = vmatpush1.msra.mxu0 0.0
    %740 = vmatprep.subr.mxu0 0.0
    %741 = vmatpush1.msra.mxu0 0.0
    %742 = vmatprep.subr.mxu0 0.0
    %743 = vmatpush1.msra.mxu0 0.0
    %744 = vmatprep.subr.mxu0 0.0
    %745 = vmatpush1.msra.mxu0 0.0
    %746 = vmatprep.subr.mxu0 0.0
    %747 = vmatpush1.msra.mxu0 0.0
    %748 = vmatprep.subr.mxu0 0.0
    %749 = vmatpush1.msra.mxu0 0.0
    %750 = vmatprep.subr.mxu0 0.0
    %751 = vmatpush1.msra.mxu0 0.0
    %752 = vmatprep.subr.mxu0 0.0
    %753 = vmatpush1.msra.mxu0 0.0
    %754 = vmatprep.subr.mxu0 0.0
    %755 = vmatpush1.msra.mxu0 0.0
    %756 = vmatprep.subr.mxu0 0.0
    %757 = vmatpush1.msra.mxu0 0.0
    %758 = vmatprep.subr.mxu0 0.0
    %759 = vmatpush1.msra.mxu0 0.0
    %760 = vmatprep.subr.mxu0 0.0
    %761 = vmatpush1.msra.mxu0 0.0
    %762 = vmatprep.subr.mxu0 0.0
    %763 = vmatpush1.msra.mxu0 0.0
    %764 = vmatprep.subr.mxu0 0.0
    %765 = vmatpush1.msra.mxu0 %v729
    %766 = vmatprep.subr.mxu0 0.0
    %767 = vmatpush2.msra.mxu0 0.0
    %768 = vmatprep.subr.mxu0 0.0
    %769 = vmatpush2.msra.mxu0 0.0
    %770 = vmatprep.subr.mxu0 0.0
    %771 = vmatpush2.msra.mxu0 0.0
    %772 = vmatprep.subr.mxu0 0.0
    %773 = vmatpush2.msra.mxu0 0.0
    %774 = vmatprep.subr.mxu0 0.0
    %775 = vmatpush2.msra.mxu0 0.0
    %776 = vmatprep.subr.mxu0 0.0
    %777 = vmatpush2.msra.mxu0 0.0
    %778 = vmatprep.subr.mxu0 0.0
    %779 = vmatpush2.msra.mxu0 0.0
    %780 = vmatprep.subr.mxu0 0.0
    %781 = vmatpush2.msra.mxu0 0.0
    %782 = vmatprep.subr.mxu0 0.0
    %783 = vmatpush2.msra.mxu0 0.0
    %784 = vmatprep.subr.mxu0 0.0
    %785 = vmatpush2.msra.mxu0 0.0
    %786 = vmatprep.subr.mxu0 0.0
    %787 = vmatpush2.msra.mxu0 0.0
    %788 = vmatprep.subr.mxu0 0.0
    %789 = vmatpush2.msra.mxu0 0.0
    %790 = vmatprep.subr.mxu0 0.0
    %791 = vmatpush2.msra.mxu0 0.0
    %792 = vmatprep.subr.mxu0 0.0
    %793 = vmatpush2.msra.mxu0 0.0
    %794 = vmatprep.subr.mxu0 0.0
    %795 = vmatpush2.msra.mxu0 0.0
    %796 = vmatprep.subr.mxu0 0.0
    %797 = vmatpush2.msra.mxu0 0.0
    %798 = vmatprep.mubr.f32.mxu0 0.0
    %799 = vmatmul.mubr.f32.gmra.mxu0 %v732
    %v800 = vpop.f32.mrf.mxu0
    %v801 = vadd.f32 0.0, %v800
    %v802 = vpop.f32.mrf.mxu0
    %803 = vdwg.mxu0
    %v804 = vrcp.pop %v648
    %v805 = vmul.f32 1.0, %v804
    %v806 = vrcp.pop %v651
    %v807 = vmul.f32 1.0, %v806
    %v808 = vmul.f32 %v725, %v805
    %v809 = vmul.f32 %v801, %v807
    %810 = vrot.lane.b32.xlu0 %v139, 112
    %v811 = vpop.permute.xlu0 %810
    %812 = vrot.lane.b32.xlu0 %v139, 80
    %v813 = vpop.permute.xlu0 %812
    %v814 = vsel %vm150, %v811, 0
    %v816 = vsel %vm150, %v813, 0
    %818 = vmatprep.subr.mxu0 0.0
    %819 = vmatpush1.xpose.msra.mxu0 0.0
    %820 = vmatprep.subr.mxu0 0.0
    %821 = vmatpush1.xpose.msra.mxu0 0.0
    %822 = vmatprep.subr.mxu0 0.0
    %823 = vmatpush1.xpose.msra.mxu0 0.0
    %824 = vmatprep.subr.mxu0 0.0
    %825 = vmatpush1.xpose.msra.mxu0 0.0
    %826 = vmatprep.subr.mxu0 0.0
    %827 = vmatpush1.xpose.msra.mxu0 0.0
    %828 = vmatprep.subr.mxu0 0.0
    %829 = vmatpush1.xpose.msra.mxu0 0.0
    %830 = vmatprep.subr.mxu0 0.0
    %831 = vmatpush1.xpose.msra.mxu0 0.0
    %832 = vmatprep.subr.mxu0 0.0
    %833 = vmatpush1.xpose.msra.mxu0 0.0
    %834 = vmatprep.subr.mxu0 0.0
    %835 = vmatpush1.xpose.msra.mxu0 0.0
    %836 = vmatprep.subr.mxu0 0.0
    %837 = vmatpush1.xpose.msra.mxu0 0.0
    %838 = vmatprep.subr.mxu0 0.0
    %839 = vmatpush1.xpose.msra.mxu0 0.0
    %840 = vmatprep.subr.mxu0 0.0
    %841 = vmatpush1.xpose.msra.mxu0 0.0
    %842 = vmatprep.subr.mxu0 0.0
    %843 = vmatpush1.xpose.msra.mxu0 0.0
    %844 = vmatprep.subr.mxu0 0.0
    %845 = vmatpush1.xpose.msra.mxu0 0.0
    %846 = vmatprep.subr.mxu0 0.0
    %847 = vmatpush1.xpose.msra.mxu0 0.0
    %848 = vmatprep.subr.mxu0 0.0
    %849 = vmatpush1.xpose.msra.mxu0 %v816
    %850 = vmatprep.subr.mxu0 0.0
    %851 = vmatpush2.xpose.msra.mxu0 0.0
    %852 = vmatprep.subr.mxu0 0.0
    %853 = vmatpush2.xpose.msra.mxu0 0.0
    %854 = vmatprep.subr.mxu0 0.0
    %855 = vmatpush2.xpose.msra.mxu0 0.0
    %856 = vmatprep.subr.mxu0 0.0
    %857 = vmatpush2.xpose.msra.mxu0 0.0
    %858 = vmatprep.subr.mxu0 0.0
    %859 = vmatpush2.xpose.msra.mxu0 0.0
    %860 = vmatprep.subr.mxu0 0.0
    %861 = vmatpush2.xpose.msra.mxu0 0.0
    %862 = vmatprep.subr.mxu0 0.0
    %863 = vmatpush2.xpose.msra.mxu0 0.0
    %864 = vmatprep.subr.mxu0 0.0
    %865 = vmatpush2.xpose.msra.mxu0 0.0
    %866 = vmatprep.subr.mxu0 0.0
    %867 = vmatpush2.xpose.msra.mxu0 0.0
    %868 = vmatprep.subr.mxu0 0.0
    %869 = vmatpush2.xpose.msra.mxu0 0.0
    %870 = vmatprep.subr.mxu0 0.0
    %871 = vmatpush2.xpose.msra.mxu0 0.0
    %872 = vmatprep.subr.mxu0 0.0
    %873 = vmatpush2.xpose.msra.mxu0 0.0
    %874 = vmatprep.subr.mxu0 0.0
    %875 = vmatpush2.xpose.msra.mxu0 0.0
    %876 = vmatprep.subr.mxu0 0.0
    %877 = vmatpush2.xpose.msra.mxu0 0.0
    %878 = vmatprep.subr.mxu0 0.0
    %879 = vmatpush2.xpose.msra.mxu0 0.0
    %880 = vmatprep.subr.mxu0 0.0
    %881 = vmatpush2.xpose.msra.mxu0 0.0
    %882 = vmatprep.mubr.f32.mxu0 0.0
    %883 = vmatmul.mubr.f32.gmra.mxu0 %v814
    %v884 = vpop.f32.mrf.mxu0
    %v885 = vadd.f32 0.0, %v884
    %v886 = vpop.f32.mrf.mxu0
    %887 = vdwg.mxu0
    %888 = vrot.lane.b32.xlu0 %v144, 112
    %v889 = vpop.permute.xlu0 %888
    %890 = vrot.lane.b32.xlu0 %v144, 80
    %v891 = vpop.permute.xlu0 %890
    %v892 = vsel %vm150, %v889, 0
    %v894 = vsel %vm150, %v891, 0
    %896 = vmatprep.subr.mxu0 0.0
    %897 = vmatpush1.xpose.msra.mxu0 0.0
    %898 = vmatprep.subr.mxu0 0.0
    %899 = vmatpush1.xpose.msra.mxu0 0.0
    %900 = vmatprep.subr.mxu0 0.0
    %901 = vmatpush1.xpose.msra.mxu0 0.0
    %902 = vmatprep.subr.mxu0 0.0
    %903 = vmatpush1.xpose.msra.mxu0 0.0
    %904 = vmatprep.subr.mxu0 0.0
    %905 = vmatpush1.xpose.msra.mxu0 0.0
    %906 = vmatprep.subr.mxu0 0.0
    %907 = vmatpush1.xpose.msra.mxu0 0.0
    %908 = vmatprep.subr.mxu0 0.0
    %909 = vmatpush1.xpose.msra.mxu0 0.0
    %910 = vmatprep.subr.mxu0 0.0
    %911 = vmatpush1.xpose.msra.mxu0 0.0
    %912 = vmatprep.subr.mxu0 0.0
    %913 = vmatpush1.xpose.msra.mxu0 0.0
    %914 = vmatprep.subr.mxu0 0.0
    %915 = vmatpush1.xpose.msra.mxu0 0.0
    %916 = vmatprep.subr.mxu0 0.0
    %917 = vmatpush1.xpose.msra.mxu0 0.0
    %918 = vmatprep.subr.mxu0 0.0
    %919 = vmatpush1.xpose.msra.mxu0 0.0
    %920 = vmatprep.subr.mxu0 0.0
    %921 = vmatpush1.xpose.msra.mxu0 0.0
    %922 = vmatprep.subr.mxu0 0.0
    %923 = vmatpush1.xpose.msra.mxu0 0.0
    %924 = vmatprep.subr.mxu0 0.0
    %925 = vmatpush1.xpose.msra.mxu0 0.0
    %926 = vmatprep.subr.mxu0 0.0
    %927 = vmatpush1.xpose.msra.mxu0 %v894
    %928 = vmatprep.subr.mxu0 0.0
    %929 = vmatpush2.xpose.msra.mxu0 0.0
    %930 = vmatprep.subr.mxu0 0.0
    %931 = vmatpush2.xpose.msra.mxu0 0.0
    %932 = vmatprep.subr.mxu0 0.0
    %933 = vmatpush2.xpose.msra.mxu0 0.0
    %934 = vmatprep.subr.mxu0 0.0
    %935 = vmatpush2.xpose.msra.mxu0 0.0
    %936 = vmatprep.subr.mxu0 0.0
    %937 = vmatpush2.xpose.msra.mxu0 0.0
    %938 = vmatprep.subr.mxu0 0.0
    %939 = vmatpush2.xpose.msra.mxu0 0.0
    %940 = vmatprep.subr.mxu0 0.0
    %941 = vmatpush2.xpose.msra.mxu0 0.0
    %942 = vmatprep.subr.mxu0 0.0
    %943 = vmatpush2.xpose.msra.mxu0 0.0
    %944 = vmatprep.subr.mxu0 0.0
    %945 = vmatpush2.xpose.msra.mxu0 0.0
    %946 = vmatprep.subr.mxu0 0.0
    %947 = vmatpush2.xpose.msra.mxu0 0.0
    %948 = vmatprep.subr.mxu0 0.0
    %949 = vmatpush2.xpose.msra.mxu0 0.0
    %950 = vmatprep.subr.mxu0 0.0
    %951 = vmatpush2.xpose.msra.mxu0 0.0
    %952 = vmatprep.subr.mxu0 0.0
    %953 = vmatpush2.xpose.msra.mxu0 0.0
    %954 = vmatprep.subr.mxu0 0.0
    %955 = vmatpush2.xpose.msra.mxu0 0.0
    %956 = vmatprep.subr.mxu0 0.0
    %957 = vmatpush2.xpose.msra.mxu0 0.0
    %958 = vmatprep.subr.mxu0 0.0
    %959 = vmatpush2.xpose.msra.mxu0 0.0
    %960 = vmatprep.mubr.f32.mxu0 0.0
    %961 = vmatmul.mubr.f32.gmra.mxu0 %v892
    %v962 = vpop.f32.mrf.mxu0
    %v963 = vadd.f32 0.0, %v962
    %v964 = vpop.f32.mrf.mxu0
    %965 = vdwg.mxu0
    %v966 = vsel %vm150, %v885, -inf
    %967 = vmax.xlane.f32.xlu0 %v966
    %v968 = vpop.xlane.xlu0 %967
    %v969 = vsel %vm150, %v963, -inf
    %970 = vmax.xlane.f32.xlu0 %v969
    %v971 = vpop.xlane.xlu0 %970
    %v972 = vsub.f32 %v885, %v968
    %v973 = vsub.f32 %v963, %v971
    %v974 = vmul.f32 %v972, 1.442695
    %v975 = vpow.pop %v974
    %v976 = vmul.f32 %v973, 1.442695
    %v977 = vpow.pop %v976
    %v978 = vsel %vm150, %v975, 0.0
    %979 = vadd.xlane.f32.xlu0 %v978
    %v980 = vpop.xlane.xlu0 %979
    %v981 = vsel %vm150, %v977, 0.0
    %982 = vadd.xlane.f32.xlu0 %v981
    %v983 = vpop.xlane.xlu0 %982
    %984 = vrot.lane.b32.xlu0 %v139, 48
    %v985 = vpop.permute.xlu0 %984
    %v988 = vsel %vm150, %v975, 0
    %990 = vmatprep.subr.mxu0 0.0
    %991 = vmatpush1.msra.mxu0 0.0
    %992 = vmatprep.subr.mxu0 0.0
    %993 = vmatpush1.msra.mxu0 0.0
    %994 = vmatprep.subr.mxu0 0.0
    %995 = vmatpush1.msra.mxu0 0.0
    %996 = vmatprep.subr.mxu0 0.0
    %997 = vmatpush1.msra.mxu0 0.0
    %998 = vmatprep.subr.mxu0 0.0
    %999 = vmatpush1.msra.mxu0 0.0
    %1000 = vmatprep.subr.mxu0 0.0
    %1001 = vmatpush1.msra.mxu0 0.0
    %1002 = vmatprep.subr.mxu0 0.0
    %1003 = vmatpush1.msra.mxu0 0.0
    %1004 = vmatprep.subr.mxu0 0.0
    %1005 = vmatpush1.msra.mxu0 0.0
    %1006 = vmatprep.subr.mxu0 0.0
    %1007 = vmatpush1.msra.mxu0 0.0
    %1008 = vmatprep.subr.mxu0 0.0
    %1009 = vmatpush1.msra.mxu0 0.0
    %1010 = vmatprep.subr.mxu0 0.0
    %1011 = vmatpush1.msra.mxu0 0.0
    %1012 = vmatprep.subr.mxu0 0.0
    %1013 = vmatpush1.msra.mxu0 0.0
    %1014 = vmatprep.subr.mxu0 0.0
    %1015 = vmatpush1.msra.mxu0 0.0
    %1016 = vmatprep.subr.mxu0 0.0
    %1017 = vmatpush1.msra.mxu0 0.0
    %1018 = vmatprep.subr.mxu0 0.0
    %1019 = vmatpush1.msra.mxu0 0.0
    %1020 = vmatprep.subr.mxu0 0.0
    %1021 = vmatpush1.msra.mxu0 %v985
    %1022 = vmatprep.subr.mxu0 0.0
    %1023 = vmatpush2.msra.mxu0 0.0
    %1024 = vmatprep.subr.mxu0 0.0
    %1025 = vmatpush2.msra.mxu0 0.0
    %1026 = vmatprep.subr.mxu0 0.0
    %1027 = vmatpush2.msra.mxu0 0.0
    %1028 = vmatprep.subr.mxu0 0.0
    %1029 = vmatpush2.msra.mxu0 0.0
    %1030 = vmatprep.subr.mxu0 0.0
    %1031 = vmatpush2.msra.mxu0 0.0
    %1032 = vmatprep.subr.mxu0 0.0
    %1033 = vmatpush2.msra.mxu0 0.0
    %1034 = vmatprep.subr.mxu0 0.0
    %1035 = vmatpush2.msra.mxu0 0.0
    %1036 = vmatprep.subr.mxu0 0.0
    %1037 = vmatpush2.msra.mxu0 0.0
    %1038 = vmatprep.subr.mxu0 0.0
    %1039 = vmatpush2.msra.mxu0 0.0
    %1040 = vmatprep.subr.mxu0 0.0
    %1041 = vmatpush2.msra.mxu0 0.0
    %1042 = vmatprep.subr.mxu0 0.0
    %1043 = vmatpush2.msra.mxu0 0.0
    %1044 = vmatprep.subr.mxu0 0.0
    %1045 = vmatpush2.msra.mxu0 0.0
    %1046 = vmatprep.subr.mxu0 0.0
    %1047 = vmatpush2.msra.mxu0 0.0
    %1048 = vmatprep.subr.mxu0 0.0
    %1049 = vmatpush2.msra.mxu0 0.0
    %1050 = vmatprep.subr.mxu0 0.0
    %1051 = vmatpush2.msra.mxu0 0.0
    %1052 = vmatprep.subr.mxu0 0.0
    %1053 = vmatpush2.msra.mxu0 0.0
    %1054 = vmatprep.mubr.f32.mxu0 0.0
    %1055 = vmatmul.mubr.f32.gmra.mxu0 %v988
    %v1056 = vpop.f32.mrf.mxu0
    %v1057 = vadd.f32 0.0, %v1056
    %v1058 = vpop.f32.mrf.mxu0
    %1059 = vdwg.mxu0
    %1060 = vrot.lane.b32.xlu0 %v144, 48
    %v1061 = vpop.permute.xlu0 %1060
    %v1064 = vsel %vm150, %v977, 0
    %1066 = vmatprep.subr.mxu0 0.0
    %1067 = vmatpush1.msra.mxu0 0.0
    %1068 = vmatprep.subr.mxu0 0.0
    %1069 = vmatpush1.msra.mxu0 0.0
    %1070 = vmatprep.subr.mxu0 0.0
    %1071 = vmatpush1.msra.mxu0 0.0
    %1072 = vmatprep.subr.mxu0 0.0
    %1073 = vmatpush1.msra.mxu0 0.0
    %1074 = vmatprep.subr.mxu0 0.0
    %1075 = vmatpush1.msra.mxu0 0.0
    %1076 = vmatprep.subr.mxu0 0.0
    %1077 = vmatpush1.msra.mxu0 0.0
    %1078 = vmatprep.subr.mxu0 0.0
    %1079 = vmatpush1.msra.mxu0 0.0
    %1080 = vmatprep.subr.mxu0 0.0
    %1081 = vmatpush1.msra.mxu0 0.0
    %1082 = vmatprep.subr.mxu0 0.0
    %1083 = vmatpush1.msra.mxu0 0.0
    %1084 = vmatprep.subr.mxu0 0.0
    %1085 = vmatpush1.msra.mxu0 0.0
    %1086 = vmatprep.subr.mxu0 0.0
    %1087 = vmatpush1.msra.mxu0 0.0
    %1088 = vmatprep.subr.mxu0 0.0
    %1089 = vmatpush1.msra.mxu0 0.0
    %1090 = vmatprep.subr.mxu0 0.0
    %1091 = vmatpush1.msra.mxu0 0.0
    %1092 = vmatprep.subr.mxu0 0.0
    %1093 = vmatpush1.msra.mxu0 0.0
    %1094 = vmatprep.subr.mxu0 0.0
    %1095 = vmatpush1.msra.mxu0 0.0
    %1096 = vmatprep.subr.mxu0 0.0
    %1097 = vmatpush1.msra.mxu0 %v1061
    %1098 = vmatprep.subr.mxu0 0.0
    %1099 = vmatpush2.msra.mxu0 0.0
    %1100 = vmatprep.subr.mxu0 0.0
    %1101 = vmatpush2.msra.mxu0 0.0
    %1102 = vmatprep.subr.mxu0 0.0
    %1103 = vmatpush2.msra.mxu0 0.0
    %1104 = vmatprep.subr.mxu0 0.0
    %1105 = vmatpush2.msra.mxu0 0.0
    %1106 = vmatprep.subr.mxu0 0.0
    %1107 = vmatpush2.msra.mxu0 0.0
    %1108 = vmatprep.subr.mxu0 0.0
    %1109 = vmatpush2.msra.mxu0 0.0
    %1110 = vmatprep.subr.mxu0 0.0
    %1111 = vmatpush2.msra.mxu0 0.0
    %1112 = vmatprep.subr.mxu0 0.0
    %1113 = vmatpush2.msra.mxu0 0.0
    %1114 = vmatprep.subr.mxu0 0.0
    %1115 = vmatpush2.msra.mxu0 0.0
    %1116 = vmatprep.subr.mxu0 0.0
    %1117 = vmatpush2.msra.mxu0 0.0
    %1118 = vmatprep.subr.mxu0 0.0
    %1119 = vmatpush2.msra.mxu0 0.0
    %1120 = vmatprep.subr.mxu0 0.0
    %1121 = vmatpush2.msra.mxu0 0.0
    %1122 = vmatprep.subr.mxu0 0.0
    %1123 = vmatpush2.msra.mxu0 0.0
    %1124 = vmatprep.subr.mxu0 0.0
    %1125 = vmatpush2.msra.mxu0 0.0
    %1126 = vmatprep.subr.mxu0 0.0
    %1127 = vmatpush2.msra.mxu0 0.0
    %1128 = vmatprep.subr.mxu0 0.0
    %1129 = vmatpush2.msra.mxu0 0.0
    %1130 = vmatprep.mubr.f32.mxu0 0.0
    %1131 = vmatmul.mubr.f32.gmra.mxu0 %v1064
    %v1132 = vpop.f32.mrf.mxu0
    %v1133 = vadd.f32 0.0, %v1132
    %v1134 = vpop.f32.mrf.mxu0
    %1135 = vdwg.mxu0
    %v1136 = vrcp.pop %v980
    %v1137 = vmul.f32 1.0, %v1136
    %v1138 = vrcp.pop %v983
    %v1139 = vmul.f32 1.0, %v1138
    %v1140 = vmul.f32 %v1057, %v1137
    %v1141 = vmul.f32 %v1133, %v1139
    %1142 = vrot.lane.b32.xlu0 %v139, 104
    %v1143 = vpop.permute.xlu0 %1142
    %1144 = vrot.lane.b32.xlu0 %v139, 72
    %v1145 = vpop.permute.xlu0 %1144
    %v1146 = vsel %vm150, %v1143, 0
    %v1148 = vsel %vm150, %v1145, 0
    %1150 = vmatprep.subr.mxu0 0.0
    %1151 = vmatpush1.xpose.msra.mxu0 0.0
    %1152 = vmatprep.subr.mxu0 0.0
    %1153 = vmatpush1.xpose.msra.mxu0 0.0
    %1154 = vmatprep.subr.mxu0 0.0
    %1155 = vmatpush1.xpose.msra.mxu0 0.0
    %1156 = vmatprep.subr.mxu0 0.0
    %1157 = vmatpush1.xpose.msra.mxu0 0.0
    %1158 = vmatprep.subr.mxu0 0.0
    %1159 = vmatpush1.xpose.msra.mxu0 0.0
    %1160 = vmatprep.subr.mxu0 0.0
    %1161 = vmatpush1.xpose.msra.mxu0 0.0
    %1162 = vmatprep.subr.mxu0 0.0
    %1163 = vmatpush1.xpose.msra.mxu0 0.0
    %1164 = vmatprep.subr.mxu0 0.0
    %1165 = vmatpush1.xpose.msra.mxu0 0.0
    %1166 = vmatprep.subr.mxu0 0.0
    %1167 = vmatpush1.xpose.msra.mxu0 0.0
    %1168 = vmatprep.subr.mxu0 0.0
    %1169 = vmatpush1.xpose.msra.mxu0 0.0
    %1170 = vmatprep.subr.mxu0 0.0
    %1171 = vmatpush1.xpose.msra.mxu0 0.0
    %1172 = vmatprep.subr.mxu0 0.0
    %1173 = vmatpush1.xpose.msra.mxu0 0.0
    %1174 = vmatprep.subr.mxu0 0.0
    %1175 = vmatpush1.xpose.msra.mxu0 0.0
    %1176 = vmatprep.subr.mxu0 0.0
    %1177 = vmatpush1.xpose.msra.mxu0 0.0
    %1178 = vmatprep.subr.mxu0 0.0
    %1179 = vmatpush1.xpose.msra.mxu0 0.0
    %1180 = vmatprep.subr.mxu0 0.0
    %1181 = vmatpush1.xpose.msra.mxu0 %v1148
    %1182 = vmatprep.subr.mxu0 0.0
    %1183 = vmatpush2.xpose.msra.mxu0 0.0
    %1184 = vmatprep.subr.mxu0 0.0
    %1185 = vmatpush2.xpose.msra.mxu0 0.0
    %1186 = vmatprep.subr.mxu0 0.0
    %1187 = vmatpush2.xpose.msra.mxu0 0.0
    %1188 = vmatprep.subr.mxu0 0.0
    %1189 = vmatpush2.xpose.msra.mxu0 0.0
    %1190 = vmatprep.subr.mxu0 0.0
    %1191 = vmatpush2.xpose.msra.mxu0 0.0
    %1192 = vmatprep.subr.mxu0 0.0
    %1193 = vmatpush2.xpose.msra.mxu0 0.0
    %1194 = vmatprep.subr.mxu0 0.0
    %1195 = vmatpush2.xpose.msra.mxu0 0.0
    %1196 = vmatprep.subr.mxu0 0.0
    %1197 = vmatpush2.xpose.msra.mxu0 0.0
    %1198 = vmatprep.subr.mxu0 0.0
    %1199 = vmatpush2.xpose.msra.mxu0 0.0
    %1200 = vmatprep.subr.mxu0 0.0
    %1201 = vmatpush2.xpose.msra.mxu0 0.0
    %1202 = vmatprep.subr.mxu0 0.0
    %1203 = vmatpush2.xpose.msra.mxu0 0.0
    %1204 = vmatprep.subr.mxu0 0.0
    %1205 = vmatpush2.xpose.msra.mxu0 0.0
    %1206 = vmatprep.subr.mxu0 0.0
    %1207 = vmatpush2.xpose.msra.mxu0 0.0
    %1208 = vmatprep.subr.mxu0 0.0
    %1209 = vmatpush2.xpose.msra.mxu0 0.0
    %1210 = vmatprep.subr.mxu0 0.0
    %1211 = vmatpush2.xpose.msra.mxu0 0.0
    %1212 = vmatprep.subr.mxu0 0.0
    %1213 = vmatpush2.xpose.msra.mxu0 0.0
    %1214 = vmatprep.mubr.f32.mxu0 0.0
    %1215 = vmatmul.mubr.f32.gmra.mxu0 %v1146
    %v1216 = vpop.f32.mrf.mxu0
    %v1217 = vadd.f32 0.0, %v1216
    %v1218 = vpop.f32.mrf.mxu0
    %1219 = vdwg.mxu0
    %1220 = vrot.lane.b32.xlu0 %v144, 104
    %v1221 = vpop.permute.xlu0 %1220
    %1222 = vrot.lane.b32.xlu0 %v144, 72
    %v1223 = vpop.permute.xlu0 %1222
    %v1224 = vsel %vm150, %v1221, 0
    %v1226 = vsel %vm150, %v1223, 0
    %1228 = vmatprep.subr.mxu0 0.0
    %1229 = vmatpush1.xpose.msra.mxu0 0.0
    %1230 = vmatprep.subr.mxu0 0.0
    %1231 = vmatpush1.xpose.msra.mxu0 0.0
    %1232 = vmatprep.subr.mxu0 0.0
    %1233 = vmatpush1.xpose.msra.mxu0 0.0
    %1234 = vmatprep.subr.mxu0 0.0
    %1235 = vmatpush1.xpose.msra.mxu0 0.0
    %1236 = vmatprep.subr.mxu0 0.0
    %1237 = vmatpush1.xpose.msra.mxu0 0.0
    %1238 = vmatprep.subr.mxu0 0.0
    %1239 = vmatpush1.xpose.msra.mxu0 0.0
    %1240 = vmatprep.subr.mxu0 0.0
    %1241 = vmatpush1.xpose.msra.mxu0 0.0
    %1242 = vmatprep.subr.mxu0 0.0
    %1243 = vmatpush1.xpose.msra.mxu0 0.0
    %1244 = vmatprep.subr.mxu0 0.0
    %1245 = vmatpush1.xpose.msra.mxu0 0.0
    %1246 = vmatprep.subr.mxu0 0.0
    %1247 = vmatpush1.xpose.msra.mxu0 0.0
    %1248 = vmatprep.subr.mxu0 0.0
    %1249 = vmatpush1.xpose.msra.mxu0 0.0
    %1250 = vmatprep.subr.mxu0 0.0
    %1251 = vmatpush1.xpose.msra.mxu0 0.0
    %1252 = vmatprep.subr.mxu0 0.0
    %1253 = vmatpush1.xpose.msra.mxu0 0.0
    %1254 = vmatprep.subr.mxu0 0.0
    %1255 = vmatpush1.xpose.msra.mxu0 0.0
    %1256 = vmatprep.subr.mxu0 0.0
    %1257 = vmatpush1.xpose.msra.mxu0 0.0
    %1258 = vmatprep.subr.mxu0 0.0
    %1259 = vmatpush1.xpose.msra.mxu0 %v1226
    %1260 = vmatprep.subr.mxu0 0.0
    %1261 = vmatpush2.xpose.msra.mxu0 0.0
    %1262 = vmatprep.subr.mxu0 0.0
    %1263 = vmatpush2.xpose.msra.mxu0 0.0
    %1264 = vmatprep.subr.mxu0 0.0
    %1265 = vmatpush2.xpose.msra.mxu0 0.0
    %1266 = vmatprep.subr.mxu0 0.0
    %1267 = vmatpush2.xpose.msra.mxu0 0.0
    %1268 = vmatprep.subr.mxu0 0.0
    %1269 = vmatpush2.xpose.msra.mxu0 0.0
    %1270 = vmatprep.subr.mxu0 0.0
    %1271 = vmatpush2.xpose.msra.mxu0 0.0
    %1272 = vmatprep.subr.mxu0 0.0
    %1273 = vmatpush2.xpose.msra.mxu0 0.0
    %1274 = vmatprep.subr.mxu0 0.0
    %1275 = vmatpush2.xpose.msra.mxu0 0.0
    %1276 = vmatprep.subr.mxu0 0.0
    %1277 = vmatpush2.xpose.msra.mxu0 0.0
    %1278 = vmatprep.subr.mxu0 0.0
    %1279 = vmatpush2.xpose.msra.mxu0 0.0
    %1280 = vmatprep.subr.mxu0 0.0
    %1281 = vmatpush2.xpose.msra.mxu0 0.0
    %1282 = vmatprep.subr.mxu0 0.0
    %1283 = vmatpush2.xpose.msra.mxu0 0.0
    %1284 = vmatprep.subr.mxu0 0.0
    %1285 = vmatpush2.xpose.msra.mxu0 0.0
    %1286 = vmatprep.subr.mxu0 0.0
    %1287 = vmatpush2.xpose.msra.mxu0 0.0
    %1288 = vmatprep.subr.mxu0 0.0
    %1289 = vmatpush2.xpose.msra.mxu0 0.0
    %1290 = vmatprep.subr.mxu0 0.0
    %1291 = vmatpush2.xpose.msra.mxu0 0.0
    %1292 = vmatprep.mubr.f32.mxu0 0.0
    %1293 = vmatmul.mubr.f32.gmra.mxu0 %v1224
    %v1294 = vpop.f32.mrf.mxu0
    %v1295 = vadd.f32 0.0, %v1294
    %v1296 = vpop.f32.mrf.mxu0
    %1297 = vdwg.mxu0
    %v1298 = vsel %vm150, %v1217, -inf
    %1299 = vmax.xlane.f32.xlu0 %v1298
    %v1300 = vpop.xlane.xlu0 %1299
    %v1301 = vsel %vm150, %v1295, -inf
    %1302 = vmax.xlane.f32.xlu0 %v1301
    %v1303 = vpop.xlane.xlu0 %1302
    %v1304 = vsub.f32 %v1217, %v1300
    %v1305 = vsub.f32 %v1295, %v1303
    %v1306 = vmul.f32 %v1304, 1.442695
    %v1307 = vpow.pop %v1306
    %v1308 = vmul.f32 %v1305, 1.442695
    %v1309 = vpow.pop %v1308
    %v1310 = vsel %vm150, %v1307, 0.0
    %1311 = vadd.xlane.f32.xlu0 %v1310
    %v1312 = vpop.xlane.xlu0 %1311
    %v1313 = vsel %vm150, %v1309, 0.0
    %1314 = vadd.xlane.f32.xlu0 %v1313
    %v1315 = vpop.xlane.xlu0 %1314
    %1316 = vrot.lane.b32.xlu0 %v139, 40
    %v1317 = vpop.permute.xlu0 %1316
    %v1320 = vsel %vm150, %v1307, 0
    %1322 = vmatprep.subr.mxu0 0.0
    %1323 = vmatpush1.msra.mxu0 0.0
    %1324 = vmatprep.subr.mxu0 0.0
    %1325 = vmatpush1.msra.mxu0 0.0
    %1326 = vmatprep.subr.mxu0 0.0
    %1327 = vmatpush1.msra.mxu0 0.0
    %1328 = vmatprep.subr.mxu0 0.0
    %1329 = vmatpush1.msra.mxu0 0.0
    %1330 = vmatprep.subr.mxu0 0.0
    %1331 = vmatpush1.msra.mxu0 0.0
    %1332 = vmatprep.subr.mxu0 0.0
    %1333 = vmatpush1.msra.mxu0 0.0
    %1334 = vmatprep.subr.mxu0 0.0
    %1335 = vmatpush1.msra.mxu0 0.0
    %1336 = vmatprep.subr.mxu0 0.0
    %1337 = vmatpush1.msra.mxu0 0.0
    %1338 = vmatprep.subr.mxu0 0.0
    %1339 = vmatpush1.msra.mxu0 0.0
    %1340 = vmatprep.subr.mxu0 0.0
    %1341 = vmatpush1.msra.mxu0 0.0
    %1342 = vmatprep.subr.mxu0 0.0
    %1343 = vmatpush1.msra.mxu0 0.0
    %1344 = vmatprep.subr.mxu0 0.0
    %1345 = vmatpush1.msra.mxu0 0.0
    %1346 = vmatprep.subr.mxu0 0.0
    %1347 = vmatpush1.msra.mxu0 0.0
    %1348 = vmatprep.subr.mxu0 0.0
    %1349 = vmatpush1.msra.mxu0 0.0
    %1350 = vmatprep.subr.mxu0 0.0
    %1351 = vmatpush1.msra.mxu0 0.0
    %1352 = vmatprep.subr.mxu0 0.0
    %1353 = vmatpush1.msra.mxu0 %v1317
    %1354 = vmatprep.subr.mxu0 0.0
    %1355 = vmatpush2.msra.mxu0 0.0
    %1356 = vmatprep.subr.mxu0 0.0
    %1357 = vmatpush2.msra.mxu0 0.0
    %1358 = vmatprep.subr.mxu0 0.0
    %1359 = vmatpush2.msra.mxu0 0.0
    %1360 = vmatprep.subr.mxu0 0.0
    %1361 = vmatpush2.msra.mxu0 0.0
    %1362 = vmatprep.subr.mxu0 0.0
    %1363 = vmatpush2.msra.mxu0 0.0
    %1364 = vmatprep.subr.mxu0 0.0
    %1365 = vmatpush2.msra.mxu0 0.0
    %1366 = vmatprep.subr.mxu0 0.0
    %1367 = vmatpush2.msra.mxu0 0.0
    %1368 = vmatprep.subr.mxu0 0.0
    %1369 = vmatpush2.msra.mxu0 0.0
    %1370 = vmatprep.subr.mxu0 0.0
    %1371 = vmatpush2.msra.mxu0 0.0
    %1372 = vmatprep.subr.mxu0 0.0
    %1373 = vmatpush2.msra.mxu0 0.0
    %1374 = vmatprep.subr.mxu0 0.0
    %1375 = vmatpush2.msra.mxu0 0.0
    %1376 = vmatprep.subr.mxu0 0.0
    %1377 = vmatpush2.msra.mxu0 0.0
    %1378 = vmatprep.subr.mxu0 0.0
    %1379 = vmatpush2.msra.mxu0 0.0
    %1380 = vmatprep.subr.mxu0 0.0
    %1381 = vmatpush2.msra.mxu0 0.0
    %1382 = vmatprep.subr.mxu0 0.0
    %1383 = vmatpush2.msra.mxu0 0.0
    %1384 = vmatprep.subr.mxu0 0.0
    %1385 = vmatpush2.msra.mxu0 0.0
    %1386 = vmatprep.mubr.f32.mxu0 0.0
    %1387 = vmatmul.mubr.f32.gmra.mxu0 %v1320
    %v1388 = vpop.f32.mrf.mxu0
    %v1389 = vadd.f32 0.0, %v1388
    %v1390 = vpop.f32.mrf.mxu0
    %1391 = vdwg.mxu0
    %1392 = vrot.lane.b32.xlu0 %v144, 40
    %v1393 = vpop.permute.xlu0 %1392
    %v1396 = vsel %vm150, %v1309, 0
    %1398 = vmatprep.subr.mxu0 0.0
    %1399 = vmatpush1.msra.mxu0 0.0
    %1400 = vmatprep.subr.mxu0 0.0
    %1401 = vmatpush1.msra.mxu0 0.0
    %1402 = vmatprep.subr.mxu0 0.0
    %1403 = vmatpush1.msra.mxu0 0.0
    %1404 = vmatprep.subr.mxu0 0.0
    %1405 = vmatpush1.msra.mxu0 0.0
    %1406 = vmatprep.subr.mxu0 0.0
    %1407 = vmatpush1.msra.mxu0 0.0
    %1408 = vmatprep.subr.mxu0 0.0
    %1409 = vmatpush1.msra.mxu0 0.0
    %1410 = vmatprep.subr.mxu0 0.0
    %1411 = vmatpush1.msra.mxu0 0.0
    %1412 = vmatprep.subr.mxu0 0.0
    %1413 = vmatpush1.msra.mxu0 0.0
    %1414 = vmatprep.subr.mxu0 0.0
    %1415 = vmatpush1.msra.mxu0 0.0
    %1416 = vmatprep.subr.mxu0 0.0
    %1417 = vmatpush1.msra.mxu0 0.0
    %1418 = vmatprep.subr.mxu0 0.0
    %1419 = vmatpush1.msra.mxu0 0.0
    %1420 = vmatprep.subr.mxu0 0.0
    %1421 = vmatpush1.msra.mxu0 0.0
    %1422 = vmatprep.subr.mxu0 0.0
    %1423 = vmatpush1.msra.mxu0 0.0
    %1424 = vmatprep.subr.mxu0 0.0
    %1425 = vmatpush1.msra.mxu0 0.0
    %1426 = vmatprep.subr.mxu0 0.0
    %1427 = vmatpush1.msra.mxu0 0.0
    %1428 = vmatprep.subr.mxu0 0.0
    %1429 = vmatpush1.msra.mxu0 %v1393
    %1430 = vmatprep.subr.mxu0 0.0
    %1431 = vmatpush2.msra.mxu0 0.0
    %1432 = vmatprep.subr.mxu0 0.0
    %1433 = vmatpush2.msra.mxu0 0.0
    %1434 = vmatprep.subr.mxu0 0.0
    %1435 = vmatpush2.msra.mxu0 0.0
    %1436 = vmatprep.subr.mxu0 0.0
    %1437 = vmatpush2.msra.mxu0 0.0
    %1438 = vmatprep.subr.mxu0 0.0
    %1439 = vmatpush2.msra.mxu0 0.0
    %1440 = vmatprep.subr.mxu0 0.0
    %1441 = vmatpush2.msra.mxu0 0.0
    %1442 = vmatprep.subr.mxu0 0.0
    %1443 = vmatpush2.msra.mxu0 0.0
    %1444 = vmatprep.subr.mxu0 0.0
    %1445 = vmatpush2.msra.mxu0 0.0
    %1446 = vmatprep.subr.mxu0 0.0
    %1447 = vmatpush2.msra.mxu0 0.0
    %1448 = vmatprep.subr.mxu0 0.0
    %1449 = vmatpush2.msra.mxu0 0.0
    %1450 = vmatprep.subr.mxu0 0.0
    %1451 = vmatpush2.msra.mxu0 0.0
    %1452 = vmatprep.subr.mxu0 0.0
    %1453 = vmatpush2.msra.mxu0 0.0
    %1454 = vmatprep.subr.mxu0 0.0
    %1455 = vmatpush2.msra.mxu0 0.0
    %1456 = vmatprep.subr.mxu0 0.0
    %1457 = vmatpush2.msra.mxu0 0.0
    %1458 = vmatprep.subr.mxu0 0.0
    %1459 = vmatpush2.msra.mxu0 0.0
    %1460 = vmatprep.subr.mxu0 0.0
    %1461 = vmatpush2.msra.mxu0 0.0
    %1462 = vmatprep.mubr.f32.mxu0 0.0
    %1463 = vmatmul.mubr.f32.gmra.mxu0 %v1396
    %v1464 = vpop.f32.mrf.mxu0
    %v1465 = vadd.f32 0.0, %v1464
    %v1466 = vpop.f32.mrf.mxu0
    %1467 = vdwg.mxu0
    %v1468 = vrcp.pop %v1312
    %v1469 = vmul.f32 1.0, %v1468
    %v1470 = vrcp.pop %v1315
    %v1471 = vmul.f32 1.0, %v1470
    %v1472 = vmul.f32 %v1389, %v1469
    %v1473 = vmul.f32 %v1465, %v1471
    %1476 = vrot.lane.b32.xlu0 %v808, 8
    %v1477 = vpop.permute.xlu0 %1476
    %1478 = vrot.lane.b32.xlu0 %v809, 8
    %v1479 = vpop.permute.xlu0 %1478
    %1484 = vrot.lane.b32.xlu0 %v1140, 16
    %v1485 = vpop.permute.xlu0 %1484
    %1486 = vrot.lane.b32.xlu0 %v1141, 16
    %v1487 = vpop.permute.xlu0 %1486
    %1492 = vrot.lane.b32.xlu0 %v1472, 24
    %v1493 = vpop.permute.xlu0 %1492
    %1494 = vrot.lane.b32.xlu0 %v1473, 24
    %v1495 = vpop.permute.xlu0 %1494
    %v1498 = vsel %vm150, %v476, %v1477
    %v1499 = vsel %vm150, %v477, %v1479
    %vm1500 = vcmask 130048
    %v1501 = vsel %vm1500, %v1498, %v1485
    %v1502 = vsel %vm1500, %v1499, %v1487
    %vm1503 = vcmask 195584
    %v1504 = vsel %vm1503, %v1501, %v1493
    %v1505 = vsel %vm1503, %v1502, %v1495
    %v1506 = vld [vmem:[#allocation7] sm:$0xff]
    %v1507 = vld [vmem:[#allocation7 + $0x8] sm:$0xff]
    %v1508 = vld [vmem:[#allocation7 + $0x10] sm:$0xff]
    %v1509 = vld [vmem:[#allocation7 + $0x18] sm:$0xff]
    %v1510 = vld [vmem:[%s3] sm:$0x1]
    %v1512 = vlaneseq
    %v1513 = vshrl.u32 %v1512, 7
    %v1514 = vsub.s32 0, %v1513
    %v1515 = vrot.slane %v1510, %v1514
    %v1518 = vsel %vm65, %v1504, 0
    %v1521 = vsel %vm65, %v1505, 0
    %1523 = vmatprep.subr.mxu0 0.0
    %1524 = vmatpush1.msra.mxu0 0.0
    %1525 = vmatprep.subr.mxu0 0.0
    %1526 = vmatpush1.msra.mxu0 0.0
    %1527 = vmatprep.subr.mxu0 0.0
    %1528 = vmatpush1.msra.mxu0 0.0
    %1529 = vmatprep.subr.mxu0 0.0
    %1530 = vmatpush1.msra.mxu0 0.0
    %1531 = vmatprep.subr.mxu0 0.0
    %1532 = vmatpush1.msra.mxu0 0.0
    %1533 = vmatprep.subr.mxu0 0.0
    %1534 = vmatpush1.msra.mxu0 0.0
    %1535 = vmatprep.subr.mxu0 0.0
    %1536 = vmatpush1.msra.mxu0 0.0
    %1537 = vmatprep.subr.mxu0 0.0
    %1538 = vmatpush1.msra.mxu0 0.0
    %1539 = vmatprep.subr.mxu0 0.0
    %1540 = vmatpush1.msra.mxu0 0.0
    %1541 = vmatprep.subr.mxu0 0.0
    %1542 = vmatpush1.msra.mxu0 0.0
    %1543 = vmatprep.subr.mxu0 0.0
    %1544 = vmatpush1.msra.mxu0 0.0
    %1545 = vmatprep.subr.mxu0 0.0
    %1546 = vmatpush1.msra.mxu0 0.0
    %1547 = vmatprep.subr.mxu0 0.0
    %1548 = vmatpush1.msra.mxu0 %v1509
    %1549 = vmatprep.subr.mxu0 0.0
    %1550 = vmatpush1.msra.mxu0 %v1508
    %1551 = vmatprep.subr.mxu0 0.0
    %1552 = vmatpush1.msra.mxu0 %v1507
    %1553 = vmatprep.subr.mxu0 0.0
    %1554 = vmatpush1.msra.mxu0 %v1506
    %1555 = vmatprep.subr.mxu0 0.0
    %1556 = vmatpush2.msra.mxu0 0.0
    %1557 = vmatprep.subr.mxu0 0.0
    %1558 = vmatpush2.msra.mxu0 0.0
    %1559 = vmatprep.subr.mxu0 0.0
    %1560 = vmatpush2.msra.mxu0 0.0
    %1561 = vmatprep.subr.mxu0 0.0
    %1562 = vmatpush2.msra.mxu0 0.0
    %1563 = vmatprep.subr.mxu0 0.0
    %1564 = vmatpush2.msra.mxu0 0.0
    %1565 = vmatprep.subr.mxu0 0.0
    %1566 = vmatpush2.msra.mxu0 0.0
    %1567 = vmatprep.subr.mxu0 0.0
    %1568 = vmatpush2.msra.mxu0 0.0
    %1569 = vmatprep.subr.mxu0 0.0
    %1570 = vmatpush2.msra.mxu0 0.0
    %1571 = vmatprep.subr.mxu0 0.0
    %1572 = vmatpush2.msra.mxu0 0.0
    %1573 = vmatprep.subr.mxu0 0.0
    %1574 = vmatpush2.msra.mxu0 0.0
    %1575 = vmatprep.subr.mxu0 0.0
    %1576 = vmatpush2.msra.mxu0 0.0
    %1577 = vmatprep.subr.mxu0 0.0
    %1578 = vmatpush2.msra.mxu0 0.0
    %1579 = vmatprep.subr.mxu0 0.0
    %1580 = vmatpush2.msra.mxu0 0.0
    %1581 = vmatprep.subr.mxu0 0.0
    %1582 = vmatpush2.msra.mxu0 0.0
    %1583 = vmatprep.subr.mxu0 0.0
    %1584 = vmatpush2.msra.mxu0 0.0
    %1585 = vmatprep.subr.mxu0 0.0
    %1586 = vmatpush2.msra.mxu0 0.0
    %1587 = vmatprep.mubr.f32.mxu0 0.0
    %1588 = vmatmul.mubr.f32.gmra.mxu0 %v1518
    %v1589 = vpop.f32.mrf.mxu0
    %v1590 = vadd.f32 %v1515, %v1589
    %v1591 = vpop.f32.mrf.mxu0
    %1592 = vmatprep.mubr.f32.mxu0 0.0
    %1593 = vmatmul.mubr.f32.gmra.mxu0 %v1521
    %v1594 = vpop.f32.mrf.mxu0
    %v1595 = vadd.f32 %v1515, %v1594
    %v1596 = vpop.f32.mrf.mxu0
    %1597 = vdwg.mxu0
    %1598 = vst.msk [vmem:[#allocation8] sm:$0xff] %vm65, %v1590
    %1599 = vst.msk [vmem:[#allocation8 + $0x8] sm:$0xff] %vm65, %v1595
    // Predicated region
    $region30: #{tpu_custom_call.1} parent=1 // pred_check
      _
    $region31: #{tpu_custom_call.1} parent=1 // pred_check_branch
      %1601 = sbr.rel (0) target = $region33
    $region32: #{tpu_custom_call.1} parent=1 // pred_region
      %s1603 = ssub.s32 256, 256
      %1604 = vsyncadd [#allocation4], %s1603
      %s1605 = sshll.u32 [#allocation8], 4
      %s1606 = int_to_ptr.vmem [resolvable:$true] %s1605
      %1611 = dma.vmem_to_hbm [thread:$0]  %s1606, 256, %s4, [#allocation4], 128, 128, 8
    $region33: #{tpu_custom_call.1} parent=1 // pred_fallthru
      _
    // Predicated region
    $region34: #{tpu_custom_call.1} parent=1 // pred_check
      _
    $region35: #{tpu_custom_call.1} parent=1 // pred_check_branch
      %1613 = sbr.rel (0) target = $region37
    $region36: #{tpu_custom_call.1} parent=1 // pred_region
      %1614 = dma.done [#allocation4], 256
    $region37: #{tpu_custom_call.1} parent=1 // pred_fallthru
      _
    %1615 = vsyncpa [#allocation3], 1
    %1616 = vsyncpa [#allocation6], 1
    %1617 = vsyncpa [#allocation4], 1

</llo_original>
